<compile_context>
chip_gen: v5e
topology: v5e:2x2
jax: 0.10.0
libtpu: 0.0.40
codegen_flags: <defaults>
</compile_context>

<pallas_src>
import jax
import jax.numpy as jnp
from jax.experimental import pallas as pl
from jax.experimental.pallas import tpu as pltpu

D = 256  # fixed by the module: w = eye(2 * 128), RNNCell input size = 256
H = 2    # RNNCell hidden size / columns of self.h


def odefunc_kernel(x_ref, xk_ref, x0_ref, adj_ref, side_ref, wih_ref, weff_ref,
                   out_ref, ax_acc):
    k = pl.program_id(1)

    # --- K-tiled ax = adj @ x: accumulate partial products in VMEM scratch ---
    @pl.when(k == 0)
    def _init():
        ax_acc[...] = jnp.zeros_like(ax_acc)

    ax_acc[...] += jnp.dot(adj_ref[...], xk_ref[...],
                           preferred_element_type=jnp.float32)

    # --- epilogue on the last K step: RNN gate, xw matmul, fused f ---
    @pl.when(k == pl.num_programs(1) - 1)
    def _epilogue():
        x = x_ref[...]                              # (tm, D) row tile
        side = side_ref[...]                        # (tm, 128) packed side inputs
        alpha_t = side[:, 0:1]                      # alpha_train
        b0 = side[:, 1:2]                           # folded RNN bias, col 0
        b1 = side[:, 2:3]                           # folded RNN bias, col 1

        # nn.RNNCell(256, 2): 2-column projection done on VPU/XLU
        # (broadcast mul + lane reduce) — no wasted MXU column-group pass.
        wih = wih_ref[...]                          # (2, D)
        pre0 = jnp.sum(x * wih[0:1, :], axis=-1, keepdims=True) + b0
        pre1 = jnp.sum(x * wih[1:2, :], axis=-1, keepdims=True) + b1
        scale_alpha = jnp.tanh(pre0)                # alpha_new[:, 0]
        shift_alpha = jnp.tanh(pre1)                # alpha_new[:, 1]
        alph = jax.nn.sigmoid(alpha_t * scale_alpha + shift_alpha)   # (tm, 1)

        # xw = x @ W_eff, with W_eff = (w * clamp(d,0,1)) @ w.T precomputed.
        xw = jnp.dot(x, weff_ref[...], preferred_element_type=jnp.float32)

        # f = alph * 0.5 * (ax - x) + xw - x + x0
        out_ref[...] = (alph * 0.5 * (ax_acc[...] - x) + xw - x
                        + x0_ref[...]).astype(out_ref.dtype)


def odefunc_forward(x, x0, adj, h, w_ih, w_hh, b_ih, b_hh, alpha_train, w, d,
                    *, tm=None, tk=None):
    """Pure-functional Pallas implementation of ODEFuncW.forward(t, x)."""
    N, Dx = x.shape

    # Row tile (multiple of 8) and contraction tile (multiple of 128).
    if tm is None:
        tm = min(256, pl.cdiv(N, 8) * 8)
    if tk is None:
        tk = min(512, pl.cdiv(N, 128) * 128)
    Nm = pl.cdiv(N, tm) * tm            # padded row extent
    Nk = pl.cdiv(N, tk) * tk            # padded contraction extent

    # --- one-time wrapper precomputes (exact, plain XLA) ---
    W_eff = ((w * jnp.clip(d, 0.0, 1.0)) @ w.T).astype(x.dtype)    # (D, D)
    bias = (h @ w_hh.T + b_ih + b_hh).astype(x.dtype)              # (N, 2)

    # Pack narrow per-row inputs into one lane-padded (Nm, 128) array:
    # col 0 = alpha_train, cols 1:3 = folded RNN bias.
    side = jnp.zeros((Nm, 128), dtype=x.dtype)
    side = side.at[:N, 0].set(alpha_train.astype(x.dtype))
    side = side.at[:N, 1:3].set(bias)

    # Zero-pad so partial tiles contribute exactly 0 along the contraction
    # and padded rows never produce NaN/Inf.
    def pad_rows(a, rows):
        return a if a.shape[0] == rows else jnp.pad(a, ((0, rows - a.shape[0]), (0, 0)))

    x_m = pad_rows(x, Nm)                                   # (Nm, D) epilogue row tiles
    x_k = pad_rows(x, Nk)                                   # (Nk, D) contraction chunks
    x0_m = pad_rows(x0, Nm)                                  # (Nm, D)
    adj_p = jnp.pad(adj, ((0, Nm - N), (0, Nk - N)))         # (Nm, Nk)

    grid = (Nm // tm, Nk // tk)

    out = pl.pallas_call(
        odefunc_kernel,
        out_shape=jax.ShapeDtypeStruct((Nm, Dx), x.dtype),
        grid=grid,
        in_specs=[
            pl.BlockSpec((tm, Dx), lambda i, k: (i, 0)),   # x row tile (epilogue)
            pl.BlockSpec((tk, Dx), lambda i, k: (k, 0)),   # x contraction chunk
            pl.BlockSpec((tm, Dx), lambda i, k: (i, 0)),   # x0 row tile
            pl.BlockSpec((tm, tk), lambda i, k: (i, k)),   # adj tile
            pl.BlockSpec((tm, 128), lambda i, k: (i, 0)),  # packed alpha + bias
            pl.BlockSpec((H, Dx), lambda i, k: (0, 0)),    # W_ih rows (constant)
            pl.BlockSpec((Dx, Dx), lambda i, k: (0, 0)),   # W_eff (constant)
        ],
        out_specs=pl.BlockSpec((tm, Dx), lambda i, k: (i, 0)),
        scratch_shapes=[pltpu.VMEM((tm, Dx), jnp.float32)],
        compiler_params=pltpu.CompilerParams(
            dimension_semantics=("parallel", "arbitrary"),
            vmem_limit_bytes=48 * 1024 * 1024),
    )(x_m, x_k, x0_m, adj_p, side, w_ih.astype(x.dtype), W_eff)

    return out[:N]


def odefunc_reference(x, x0, adj, h, w_ih, w_hh, b_ih, b_hh, alpha_train, w, d):
    """Plain-JAX reference mirroring the PyTorch forward."""
    alpha_new = jnp.tanh(x @ w_ih.T + b_ih + h @ w_hh.T + b_hh)
    scale_alpha = alpha_new[:, 0]
    shift_alpha = alpha_new[:, 1]
    at = alpha_train * scale_alpha + shift_alpha
    alph = jax.nn.sigmoid(at)[:, None]
    ax = adj @ x
    W = (w * jnp.clip(d, 0.0, 1.0)) @ w.T
    xw = x @ W
    return alph * 0.5 * (ax - x) + xw - x + x0


if __name__ == "__main__":
    N = 256          # number of graph nodes (adj.shape[1])
    TM, TK = 128, 128  # grid (2, 2): exercises row tiling AND the K accumulator

    key = jax.random.PRNGKey(0)
    (k_x, k_x0, k_adj, k_w, k_d, k_wih, k_whh, k_bih, k_bhh) = jax.random.split(key, 9)

    # Inputs
    x = jax.random.normal(k_x, (N, D), dtype=jnp.float32)
    x0 = jax.random.normal(k_x0, (N, D), dtype=jnp.float32)
    adj = jax.random.uniform(k_adj, (N, N), dtype=jnp.float32)
    adj = adj / jnp.sum(adj, axis=1, keepdims=True)   # densified "sparse" adjacency

    # Parameters (shapes from __init__; perturbed so every path is non-trivial)
    h = jnp.ones((N, H), dtype=jnp.float32)                           # self.h
    alpha_train = 0.95 * jnp.ones((N,), dtype=jnp.float32)            # self.alpha_train
    w = jnp.eye(D, dtype=jnp.float32) + 0.05 * jax.random.normal(k_w, (D, D), jnp.float32)
    d = 1.0 + 0.5 * jax.random.normal(k_d, (D,), dtype=jnp.float32)   # exercises the clamp
    s = 1.0 / jnp.sqrt(jnp.float32(H))
    w_ih = jax.random.uniform(k_wih, (H, D), minval=-s, maxval=s, dtype=jnp.float32)
    w_hh = jax.random.uniform(k_whh, (H, H), minval=-s, maxval=s, dtype=jnp.float32)
    b_ih = jax.random.uniform(k_bih, (H,), minval=-s, maxval=s, dtype=jnp.float32)
    b_hh = jax.random.uniform(k_bhh, (H,), minval=-s, maxval=s, dtype=jnp.float32)

    out = odefunc_forward(x, x0, adj, h, w_ih, w_hh, b_ih, b_hh, alpha_train, w, d,
                          tm=TM, tk=TK)
    out = jax.block_until_ready(out)

    ref = odefunc_reference(x, x0, adj, h, w_ih, w_hh, b_ih, b_hh, alpha_train, w, d)
    assert out.shape == (N, D) and out.dtype == jnp.float32
    assert jnp.allclose(out, ref, rtol=1e-3, atol=1e-3), "mismatch vs JAX reference"

    # TODO(synk): self.nfe increment and the in-place nn.Parameter reassignment of
    # alpha_train are stateful side effects with no functional Pallas equivalent.
    print("KERNEL_OK")
</pallas_src>

<mosaic_0001>
module attributes {stable_mosaic.version = 11 : i64} {
  func.func @odefunc_kernel(%arg0: i32, %arg1: i32, %arg2: memref<128x256xf32, #tpu.memory_space<vmem>>, %arg3: memref<128x256xf32, #tpu.memory_space<vmem>>, %arg4: memref<128x256xf32, #tpu.memory_space<vmem>>, %arg5: memref<128x128xf32, #tpu.memory_space<vmem>>, %arg6: memref<128x128xf32, #tpu.memory_space<vmem>>, %arg7: memref<2x256xf32, #tpu.memory_space<vmem>>, %arg8: memref<256x256xf32, #tpu.memory_space<vmem>>, %arg9: memref<128x256xf32, #tpu.memory_space<vmem>>, %arg10: memref<128x256xf32, #tpu.memory_space<vmem>>) attributes {dimension_semantics = [#tpu.dimension_semantics<parallel>, #tpu.dimension_semantics<arbitrary>], iteration_bounds = array<i64: 2, 2>, scalar_prefetch = 0 : i64, scratch_operands = 1 : i64, tpu.core_type = #tpu.core_type<tc>, window_params = [{transform_indices = @transform_0, window_bounds = array<i64: 128, 256>}, {transform_indices = @transform_1, window_bounds = array<i64: 128, 256>}, {transform_indices = @transform_2, window_bounds = array<i64: 128, 256>}, {transform_indices = @transform_3, window_bounds = array<i64: 128, 128>}, {transform_indices = @transform_4, window_bounds = array<i64: 128, 128>}, {pipeline_mode = #tpu.pipeline_mode<synchronous>, transform_indices = @transform_5, window_bounds = array<i64: 2, 256>}, {pipeline_mode = #tpu.pipeline_mode<synchronous>, transform_indices = @transform_6, window_bounds = array<i64: 256, 256>}, {transform_indices = @transform_7, window_bounds = array<i64: 128, 256>}]} {
    %c0_i32 = arith.constant 0 : i32
    %0 = arith.cmpi eq, %arg1, %c0_i32 : i32
    %1 = arith.extui %0 : i1 to i32
    %c0_i32_0 = arith.constant 0 : i32
    %2 = arith.cmpi ne, %1, %c0_i32_0 : i32
    scf.if %2 {
      %cst_9 = arith.constant 0.000000e+00 : f32
      %12 = vector.broadcast %cst_9 : f32 to vector<128x256xf32>
      %c0_10 = arith.constant 0 : index
      %c0_11 = arith.constant 0 : index
      %13 = vector.load %arg10[%c0_10, %c0_11] : memref<128x256xf32, #tpu.memory_space<vmem>>, vector<128x256xf32>
      tpu.vector_store %arg10[%c0_10, %c0_11], %12 {strides = array<i32>} : memref<128x256xf32, #tpu.memory_space<vmem>>, vector<128x256xf32>,
    } else {
    }
    %c0 = arith.constant 0 : index
    %c0_1 = arith.constant 0 : index
    %3 = vector.load %arg10[%c0, %c0_1] : memref<128x256xf32, #tpu.memory_space<vmem>>, vector<128x256xf32>
    %c0_2 = arith.constant 0 : index
    %c0_3 = arith.constant 0 : index
    %4 = vector.load %arg5[%c0_2, %c0_3] : memref<128x128xf32, #tpu.memory_space<vmem>>, vector<128x128xf32>
    %c0_4 = arith.constant 0 : index
    %c0_5 = arith.constant 0 : index
    %5 = vector.load %arg3[%c0_4, %c0_5] : memref<128x256xf32, #tpu.memory_space<vmem>>, vector<128x256xf32>
    %cst = arith.constant dense<0.000000e+00> : vector<128x256xf32>
    %6 = tpu.matmul %4, %5, %cst {dimension_numbers = #tpu.dot_dimension_numbers<[1], [0], [0], [1], [0, 0, 1, 1], [], []>} : vector<128x128xf32>, vector<128x256xf32>, vector<128x256xf32> -> vector<128x256xf32>
    %7 = arith.addf %3, %6 : vector<128x256xf32>
    %c0_6 = arith.constant 0 : index
    %c0_7 = arith.constant 0 : index
    %8 = vector.load %arg10[%c0_6, %c0_7] : memref<128x256xf32, #tpu.memory_space<vmem>>, vector<128x256xf32>
    tpu.vector_store %arg10[%c0_6, %c0_7], %7 {strides = array<i32>} : memref<128x256xf32, #tpu.memory_space<vmem>>, vector<128x256xf32>,
    %c1_i32 = arith.constant 1 : i32
    %9 = arith.cmpi eq, %arg1, %c1_i32 : i32
    %10 = arith.extui %9 : i1 to i32
    %c0_i32_8 = arith.constant 0 : i32
    %11 = arith.cmpi ne, %10, %c0_i32_8 : i32
    scf.if %11 {
      %c0_9 = arith.constant 0 : index
      %c0_10 = arith.constant 0 : index
      %12 = vector.load %arg2[%c0_9, %c0_10] : memref<128x256xf32, #tpu.memory_space<vmem>>, vector<128x256xf32>
      %c0_11 = arith.constant 0 : index
      %c0_12 = arith.constant 0 : index
      %13 = vector.load %arg6[%c0_11, %c0_12] : memref<128x128xf32, #tpu.memory_space<vmem>>, vector<128x128xf32>
      %14 = vector.extract_strided_slice %13 {offsets = [0, 0], sizes = [128, 1], strides = [1, 1]} : vector<128x128xf32> to vector<128x1xf32>
      %15 = vector.extract_strided_slice %13 {offsets = [0, 1], sizes = [128, 1], strides = [1, 1]} : vector<128x128xf32> to vector<128x1xf32>
      %16 = vector.extract_strided_slice %13 {offsets = [0, 2], sizes = [128, 1], strides = [1, 1]} : vector<128x128xf32> to vector<128x1xf32>
      %c0_13 = arith.constant 0 : index
      %c0_14 = arith.constant 0 : index
      %17 = vector.load %arg7[%c0_13, %c0_14] : memref<2x256xf32, #tpu.memory_space<vmem>>, vector<2x256xf32>
      %18 = vector.extract_strided_slice %17 {offsets = [0, 0], sizes = [1, 256], strides = [1, 1]} : vector<2x256xf32> to vector<1x256xf32>
      %19 = vector.broadcast %18 : vector<1x256xf32> to vector<128x256xf32>
      %20 = arith.mulf %12, %19 : vector<128x256xf32>
      %cst_15 = arith.constant dense<0.000000e+00> : vector<128xf32>
      %21 = vector.multi_reduction <add>, %20, %cst_15 [1] : vector<128x256xf32> to vector<128xf32>
      %22 = vector.shape_cast %21 : vector<128xf32> to vector<128x1xf32>
      %23 = arith.addf %22, %15 : vector<128x1xf32>
      %24 = vector.extract_strided_slice %17 {offsets = [1, 0], sizes = [1, 256], strides = [1, 1]} : vector<2x256xf32> to vector<1x256xf32>
      %25 = vector.broadcast %24 : vector<1x256xf32> to vector<128x256xf32>
      %26 = arith.mulf %12, %25 : vector<128x256xf32>
      %cst_16 = arith.constant dense<0.000000e+00> : vector<128xf32>
      %27 = vector.multi_reduction <add>, %26, %cst_16 [1] : vector<128x256xf32> to vector<128xf32>
      %28 = vector.shape_cast %27 : vector<128xf32> to vector<128x1xf32>
      %29 = arith.addf %28, %16 : vector<128x1xf32>
      %30 = math.tanh %23 : vector<128x1xf32>
      %31 = math.tanh %29 : vector<128x1xf32>
      %32 = arith.mulf %14, %30 : vector<128x1xf32>
      %33 = arith.addf %32, %31 : vector<128x1xf32>
      %34 = arith.negf %33 : vector<128x1xf32>
      %35 = math.exp %34 : vector<128x1xf32>
      %cst_17 = arith.constant 1.000000e+00 : f32
      %36 = vector.broadcast %cst_17 : f32 to vector<128x1xf32>
      %37 = arith.addf %36, %35 : vector<128x1xf32>
      %38 = arith.divf %36, %37 : vector<128x1xf32>
      %c0_18 = arith.constant 0 : index
      %c0_19 = arith.constant 0 : index
      %39 = vector.load %arg8[%c0_18, %c0_19] : memref<256x256xf32, #tpu.memory_space<vmem>>, vector<256x256xf32>
      %cst_20 = arith.constant dense<0.000000e+00> : vector<128x256xf32>
      %40 = tpu.matmul %12, %39, %cst_20 {dimension_numbers = #tpu.dot_dimension_numbers<[1], [0], [0], [1], [0, 0, 1, 1], [], []>} : vector<128x256xf32>, vector<256x256xf32>, vector<128x256xf32> -> vector<128x256xf32>
      %cst_21 = arith.constant 5.000000e-01 : f32
      %41 = vector.broadcast %cst_21 : f32 to vector<128x1xf32>
      %42 = arith.mulf %38, %41 : vector<128x1xf32>
      %c0_22 = arith.constant 0 : index
      %c0_23 = arith.constant 0 : index
      %43 = vector.load %arg10[%c0_22, %c0_23] : memref<128x256xf32, #tpu.memory_space<vmem>>, vector<128x256xf32>
      %44 = arith.subf %43, %12 : vector<128x256xf32>
      %45 = vector.broadcast %42 : vector<128x1xf32> to vector<128x256xf32>
      %46 = arith.mulf %45, %44 : vector<128x256xf32>
      %47 = arith.addf %46, %40 : vector<128x256xf32>
      %48 = arith.subf %47, %12 : vector<128x256xf32>
      %c0_24 = arith.constant 0 : index
      %c0_25 = arith.constant 0 : index
      %49 = vector.load %arg4[%c0_24, %c0_25] : memref<128x256xf32, #tpu.memory_space<vmem>>, vector<128x256xf32>
      %50 = arith.addf %48, %49 : vector<128x256xf32>
      %c0_26 = arith.constant 0 : index
      %c0_27 = arith.constant 0 : index
      %51 = vector.load %arg9[%c0_26, %c0_27] : memref<128x256xf32, #tpu.memory_space<vmem>>, vector<128x256xf32>
      tpu.vector_store %arg9[%c0_26, %c0_27], %50 {strides = array<i32>} : memref<128x256xf32, #tpu.memory_space<vmem>>, vector<128x256xf32>,
    } else {
    }
    return
  }
  func.func @transform_0(%arg0: i32, %arg1: i32) -> (i32, i32) {
    %c0_i32 = arith.constant 0 : i32
    %c0_i32_0 = arith.constant 0 : i32
    return %arg0, %c0_i32 : i32, i32
  }
  func.func @transform_1(%arg0: i32, %arg1: i32) -> (i32, i32) {
    %c0_i32 = arith.constant 0 : i32
    %c0_i32_0 = arith.constant 0 : i32
    return %arg1, %c0_i32 : i32, i32
  }
  func.func @transform_2(%arg0: i32, %arg1: i32) -> (i32, i32) {
    %c0_i32 = arith.constant 0 : i32
    %c0_i32_0 = arith.constant 0 : i32
    return %arg0, %c0_i32 : i32, i32
  }
  func.func @transform_3(%arg0: i32, %arg1: i32) -> (i32, i32) {
    %c0_i32 = arith.constant 0 : i32
    return %arg0, %arg1 : i32, i32
  }
  func.func @transform_4(%arg0: i32, %arg1: i32) -> (i32, i32) {
    %c0_i32 = arith.constant 0 : i32
    %c0_i32_0 = arith.constant 0 : i32
    return %arg0, %c0_i32 : i32, i32
  }
  func.func @transform_5(%arg0: i32, %arg1: i32) -> (i32, i32) {
    %c0_i32 = arith.constant 0 : i32
    %c0_i32_0 = arith.constant 0 : i32
    %c0_i32_1 = arith.constant 0 : i32
    return %c0_i32, %c0_i32_0 : i32, i32
  }
  func.func @transform_6(%arg0: i32, %arg1: i32) -> (i32, i32) {
    %c0_i32 = arith.constant 0 : i32
    %c0_i32_0 = arith.constant 0 : i32
    %c0_i32_1 = arith.constant 0 : i32
    return %c0_i32, %c0_i32_0 : i32, i32
  }
  func.func @transform_7(%arg0: i32, %arg1: i32) -> (i32, i32) {
    %c0_i32 = arith.constant 0 : i32
    %c0_i32_0 = arith.constant 0 : i32
    return %arg0, %c0_i32 : i32, i32
  }
}

</mosaic_0001>

<llo_original>
// kernel: tpu_custom_call.1
$region0: #{tpu_custom_call.1}
  #allocation0 [shape = 'u32[]', space=smem, size = 0x4, offset = 0x4, fixed_abs, tag = 'smem constant byte address 0x4 - core index']
  #allocation1 [shape = 'u32[72,128]{1,0:T(1,128)}', space=vmem, size = 0x9000, scoped, tag = 'internal scratch']
  #allocation2 [shape = 'f32[128,256]{1,0:T(8,128)}', space=vmem, size = 0x20000, scoped, tag = 'scratch operand']
  %s0 = inlined_call_operand.hbm [shape: f32[256,256], index: 0, kind: input, shape index: {}]
  %s1 = inlined_call_operand.hbm [shape: f32[256,256], index: 1, kind: input, shape index: {}]
  %s2 = inlined_call_operand.hbm [shape: f32[256,256], index: 2, kind: input, shape index: {}]
  %s3 = inlined_call_operand.hbm [shape: f32[256,256], index: 3, kind: input, shape index: {}]
  %s4 = inlined_call_operand.hbm [shape: f32[256,128], index: 4, kind: input, shape index: {}]
  %s5 = inlined_call_operand.vmem [shape: f32[2,256], index: 5, kind: input, shape index: {}]
  %s6 = inlined_call_operand.hbm [shape: f32[256,256], index: 6, kind: input, shape index: {}]
  %s7 = inlined_call_operand.hbm [shape: f32[256,256], index: 7, kind: output, shape index: {}]
  %s8 = sld [smem:[#allocation0]]
  $region93: #{tpu_custom_call.1} parent=0
    _
  %s10 = ssub.s32 1, %s8
  %s11 = scalar_select 0, %s10, %s8
  $region1: #{tpu_custom_call.1} parent=0
    #allocation3 [shape = 'u8[262144]{0}', space=vmem, size = 0x40000, scoped, tag = 'input window, operand 0']
    #allocation4 [shape = 's32[2]{0}', space=sflag, size = 0x8, scoped, tag = 'scoped memory for tpu_custom_call.1']
    #allocation5 [shape = 's32[2]{0}', space=sflag, size = 0x8, scoped, tag = 'scoped memory for tpu_custom_call.1']
    #allocation6 [shape = 'u8[262144]{0}', space=vmem, size = 0x40000, scoped, tag = 'input window, operand 1']
    #allocation7 [shape = 's32[2]{0}', space=sflag, size = 0x8, scoped, tag = 'scoped memory for tpu_custom_call.1']
    #allocation8 [shape = 'u8[262144]{0}', space=vmem, size = 0x40000, scoped, tag = 'input window, operand 2']
    #allocation9 [shape = 'u8[131072]{0}', space=vmem, size = 0x20000, scoped, tag = 'input window, operand 3']
    #allocation10 [shape = 's32[2]{0}', space=sflag, size = 0x8, scoped, tag = 'scoped memory for tpu_custom_call.1']
    #allocation11 [shape = 'u8[131072]{0}', space=vmem, size = 0x20000, scoped, tag = 'input window, operand 4']
    #allocation12 [shape = 'u8[262144]{0}', space=vmem, size = 0x40000, scoped, tag = 'input window, operand 6, single buffered']
    #allocation13 [shape = 's32[1]{0}', space=sflag, size = 0x4, scoped, tag = 'scoped memory for tpu_custom_call.1']
    #allocation14 [shape = 'u8[262144]{0}', space=vmem, size = 0x40000, scoped, tag = 'output window, operand 0']
    %12 = vsyncpa [#allocation4], 0
    %s13 = scalar_lea.sflag [#allocation4], 1
    %14 = vsyncpa %s13, 0
    %15 = vsyncpa [#allocation7], 0
    %s16 = scalar_lea.sflag [#allocation7], 1
    %17 = vsyncpa %s16, 0
    %18 = vsyncpa [#allocation10], 0
    %s19 = scalar_lea.sflag [#allocation10], 1
    %20 = vsyncpa %s19, 0
    %21 = vsyncpa [#allocation13], 0
    %22 = vsyncpa [#allocation5], 0
    %s23 = scalar_lea.sflag [#allocation5], 1
    %24 = vsyncpa %s23, 0
    loop: start=0, step=1, limit=6
    $region2: #{tpu_custom_call.1} parent=1 // loop_pre_header
      _
    $region3: #{tpu_custom_call.1} parent=1 // loop_header
      %s26 = sphi 0, %s30
      %p27 = scmp.ge.s32.totalorder %s26, 6
      %s33 = sphi 0, %s45
      %s34 = sphi 0, %s41
      %s35 = sphi 0, %s33
      %s36 = sphi 0, %s34
      %s37 = sphi 0, %s35
      %s38 = sphi 0, %s36
      %s48 = sphi 0, %s50
      %s51 = sphi 0, %s48
      %s52 = sphi 0, %s51
      %s68 = sphi 0, %s52
      %s74 = sphi 0, %s76
      %s77 = sphi 0, %s74
      %s78 = sphi 0, %s77
      %s94 = sphi 0, %s78
      %s100 = sphi 0, %s102
      %s103 = sphi 0, %s100
      %s104 = sphi 0, %s103
      %s120 = sphi 0, %s104
      %s128 = sphi 0, %s130
      %s131 = sphi 0, %s128
      %s132 = sphi 0, %s131
      %s148 = sphi 0, %s132
      %s154 = sphi 0, %s156
      %s157 = sphi 0, %s154
      %s158 = sphi 0, %s157
      %s174 = sphi 0, %s158
      %s178 = sphi 0, %s178
      %s180 = sphi 0, %s178
      %s181 = sphi 0, %s180
      %s195 = sphi 0, %s181
      %s199 = sphi 0, %s199
      %s201 = sphi 0, %s199
      %s202 = sphi 0, %s201
      %s216 = sphi 0, %s202
      %s222 = sphi 0, %s224
      %s225 = sphi 0, %s222
      %s226 = sphi 0, %s225
      %s242 = sphi 0, %s226
    $region4: #{tpu_custom_call.1} parent=1 // loop_header_branch
      %29 = sbr.rel (%p27) target = $region8
    $region5: #{tpu_custom_call.1} parent=1 // loop_body
      %s31 = ssub.s32 %s26, 1
      %s32 = ssub.s32 %s26, 2
      %s39 = sadd.s32 1, %s34
      %p40 = scmp.ge.s32.totalorder %s39, 2
      %s41 = scalar_select %p40, 0, %s39
      %s42 = sadd.s32 1, %s33
      %s43 = scalar_select %p40, %s42, %s33
      %p44 = scmp.ge.s32.totalorder %s43, 2
      %s45 = scalar_select %p44, 0, %s43
      %s46 = ssub.s32 %s33, %s45
      %p47 = scmp.eq.s32.totalorder %s46, 0
      %s49 = sadd.s32 %s48, 1
      %s50 = scalar_select %p47, %s48, %s49
      %p53 = pneg %p47
      %p54 = scmp.eq.s32.totalorder %s26, 3
      %p55 = por %p53, %p54
      %p56 = scmp.ne.s32.totalorder %s48, %s51
      %p57 = scmp.eq.s32.totalorder %s26, 0
      %p58 = por %p56, %p57
      %p59 = scmp.ne.s32.totalorder %s48, %s51
      %p60 = scmp.eq.s32.totalorder %s31, 3
      %p61 = por %p59, %p60
      %p62 = scmp.ne.s32.totalorder %s51, %s52
      %p63 = scmp.eq.s32.totalorder %s31, 0
      %p64 = por %p62, %p63
      %p65 = scmp.ne.s32.totalorder %s51, %s52
      %p66 = scmp.eq.s32.totalorder %s32, 3
      %p67 = por %p65, %p66
      %p69 = scmp.ne.s32.totalorder %s52, %s68
      %p70 = scmp.eq.s32.totalorder %s32, 0
      %p71 = por %p69, %p70
      %s72 = ssub.s32 %s34, %s41
      %p73 = scmp.eq.s32.totalorder %s72, 0
      %s75 = sadd.s32 %s74, 1
      %s76 = scalar_select %p73, %s74, %s75
      %p79 = pneg %p73
      %p80 = scmp.eq.s32.totalorder %s26, 3
      %p81 = por %p79, %p80
      %p82 = scmp.ne.s32.totalorder %s74, %s77
      %p83 = scmp.eq.s32.totalorder %s26, 0
      %p84 = por %p82, %p83
      %p85 = scmp.ne.s32.totalorder %s74, %s77
      %p86 = scmp.eq.s32.totalorder %s31, 3
      %p87 = por %p85, %p86
      %p88 = scmp.ne.s32.totalorder %s77, %s78
      %p89 = scmp.eq.s32.totalorder %s31, 0
      %p90 = por %p88, %p89
      %p91 = scmp.ne.s32.totalorder %s77, %s78
      %p92 = scmp.eq.s32.totalorder %s32, 3
      %p93 = por %p91, %p92
      %p95 = scmp.ne.s32.totalorder %s78, %s94
      %p96 = scmp.eq.s32.totalorder %s32, 0
      %p97 = por %p95, %p96
      %s98 = ssub.s32 %s33, %s45
      %p99 = scmp.eq.s32.totalorder %s98, 0
      %s101 = sadd.s32 %s100, 1
      %s102 = scalar_select %p99, %s100, %s101
      %p105 = pneg %p99
      %p106 = scmp.eq.s32.totalorder %s26, 3
      %p107 = por %p105, %p106
      %p108 = scmp.ne.s32.totalorder %s100, %s103
      %p109 = scmp.eq.s32.totalorder %s26, 0
      %p110 = por %p108, %p109
      %p111 = scmp.ne.s32.totalorder %s100, %s103
      %p112 = scmp.eq.s32.totalorder %s31, 3
      %p113 = por %p111, %p112
      %p114 = scmp.ne.s32.totalorder %s103, %s104
      %p115 = scmp.eq.s32.totalorder %s31, 0
      %p116 = por %p114, %p115
      %p117 = scmp.ne.s32.totalorder %s103, %s104
      %p118 = scmp.eq.s32.totalorder %s32, 3
      %p119 = por %p117, %p118
      %p121 = scmp.ne.s32.totalorder %s104, %s120
      %p122 = scmp.eq.s32.totalorder %s32, 0
      %p123 = por %p121, %p122
      %s124 = ssub.s32 %s33, %s45
      %s125 = ssub.s32 %s34, %s41
      %s126 = sor.u32 %s124, %s125
      %p127 = scmp.eq.s32.totalorder %s126, 0
      %s129 = sadd.s32 %s128, 1
      %s130 = scalar_select %p127, %s128, %s129
      %p133 = pneg %p127
      %p134 = scmp.eq.s32.totalorder %s26, 3
      %p135 = por %p133, %p134
      %p136 = scmp.ne.s32.totalorder %s128, %s131
      %p137 = scmp.eq.s32.totalorder %s26, 0
      %p138 = por %p136, %p137
      %p139 = scmp.ne.s32.totalorder %s128, %s131
      %p140 = scmp.eq.s32.totalorder %s31, 3
      %p141 = por %p139, %p140
      %p142 = scmp.ne.s32.totalorder %s131, %s132
      %p143 = scmp.eq.s32.totalorder %s31, 0
      %p144 = por %p142, %p143
      %p145 = scmp.ne.s32.totalorder %s131, %s132
      %p146 = scmp.eq.s32.totalorder %s32, 3
      %p147 = por %p145, %p146
      %p149 = scmp.ne.s32.totalorder %s132, %s148
      %p150 = scmp.eq.s32.totalorder %s32, 0
      %p151 = por %p149, %p150
      %s152 = ssub.s32 %s33, %s45
      %p153 = scmp.eq.s32.totalorder %s152, 0
      %s155 = sadd.s32 %s154, 1
      %s156 = scalar_select %p153, %s154, %s155
      %p159 = pneg %p153
      %p160 = scmp.eq.s32.totalorder %s26, 3
      %p161 = por %p159, %p160
      %p162 = scmp.ne.s32.totalorder %s154, %s157
      %p163 = scmp.eq.s32.totalorder %s26, 0
      %p164 = por %p162, %p163
      %p165 = scmp.ne.s32.totalorder %s154, %s157
      %p166 = scmp.eq.s32.totalorder %s31, 3
      %p167 = por %p165, %p166
      %p168 = scmp.ne.s32.totalorder %s157, %s158
      %p169 = scmp.eq.s32.totalorder %s31, 0
      %p170 = por %p168, %p169
      %p171 = scmp.ne.s32.totalorder %s157, %s158
      %p172 = scmp.eq.s32.totalorder %s32, 3
      %p173 = por %p171, %p172
      %p175 = scmp.ne.s32.totalorder %s158, %s174
      %p176 = scmp.eq.s32.totalorder %s32, 0
      %p177 = por %p175, %p176
      %s179 = sadd.s32 %s178, 1
      %p182 = scmp.eq.s32.totalorder %s26, 3
      %p183 = scmp.ne.s32.totalorder %s178, %s180
      %p184 = scmp.eq.s32.totalorder %s26, 0
      %p185 = por %p183, %p184
      %p186 = scmp.ne.s32.totalorder %s178, %s180
      %p187 = scmp.eq.s32.totalorder %s31, 3
      %p188 = por %p186, %p187
      %p189 = scmp.ne.s32.totalorder %s180, %s181
      %p190 = scmp.eq.s32.totalorder %s31, 0
      %p191 = por %p189, %p190
      %p192 = scmp.ne.s32.totalorder %s180, %s181
      %p193 = scmp.eq.s32.totalorder %s32, 3
      %p194 = por %p192, %p193
      %p196 = scmp.ne.s32.totalorder %s181, %s195
      %p197 = scmp.eq.s32.totalorder %s32, 0
      %p198 = por %p196, %p197
      %s200 = sadd.s32 %s199, 1
      %p203 = scmp.eq.s32.totalorder %s26, 3
      %p204 = scmp.ne.s32.totalorder %s199, %s201
      %p205 = scmp.eq.s32.totalorder %s26, 0
      %p206 = por %p204, %p205
      %p207 = scmp.ne.s32.totalorder %s199, %s201
      %p208 = scmp.eq.s32.totalorder %s31, 3
      %p209 = por %p207, %p208
      %p210 = scmp.ne.s32.totalorder %s201, %s202
      %p211 = scmp.eq.s32.totalorder %s31, 0
      %p212 = por %p210, %p211
      %p213 = scmp.ne.s32.totalorder %s201, %s202
      %p214 = scmp.eq.s32.totalorder %s32, 3
      %p215 = por %p213, %p214
      %p217 = scmp.ne.s32.totalorder %s202, %s216
      %p218 = scmp.eq.s32.totalorder %s32, 0
      %p219 = por %p217, %p218
      %s220 = ssub.s32 %s33, %s45
      %p221 = scmp.eq.s32.totalorder %s220, 0
      %s223 = sadd.s32 %s222, 1
      %s224 = scalar_select %p221, %s222, %s223
      %p227 = pneg %p221
      %p228 = scmp.eq.s32.totalorder %s26, 3
      %p229 = por %p227, %p228
      %p230 = scmp.ne.s32.totalorder %s222, %s225
      %p231 = scmp.eq.s32.totalorder %s26, 0
      %p232 = por %p230, %p231
      %p233 = scmp.ne.s32.totalorder %s222, %s225
      %p234 = scmp.eq.s32.totalorder %s31, 3
      %p235 = por %p233, %p234
      %p236 = scmp.ne.s32.totalorder %s225, %s226
      %p237 = scmp.eq.s32.totalorder %s31, 0
      %p238 = por %p236, %p237
      %p239 = scmp.ne.s32.totalorder %s225, %s226
      %p240 = scmp.eq.s32.totalorder %s32, 3
      %p241 = por %p239, %p240
      %p243 = scmp.ne.s32.totalorder %s226, %s242
      %p244 = scmp.eq.s32.totalorder %s32, 0
      %p245 = por %p243, %p244
      %p246 = scmp.le.s32.totalorder 1, %s26
      %p247 = scmp.lt.s32.totalorder %s26, 5
      %p248 = pnand %p246, %p247
      %p249 = pneg %p248
      // Predicated region
      $region9: #{tpu_custom_call.1} parent=5 // pred_check
        _
      $region10: #{tpu_custom_call.1} parent=5 // pred_check_branch
        %251 = sbr.rel (%p248) target = $region12
      $region11: #{tpu_custom_call.1} parent=5 // pred_region
        %s252 = ssub.s32 %s26, 1
        // Predicated region
        $region13: #{tpu_custom_call.1} parent=11 // pred_check
          %p253 = pneg %p191
        $region14: #{tpu_custom_call.1} parent=11 // pred_check_branch
          %255 = sbr.rel (%p253) target = $region16
        $region15: #{tpu_custom_call.1} parent=11 // pred_region
          _
        $region16: #{tpu_custom_call.1} parent=11 // pred_fallthru
          _
        // Predicated region
        $region17: #{tpu_custom_call.1} parent=11 // pred_check
          %p256 = pneg %p212
        $region18: #{tpu_custom_call.1} parent=11 // pred_check_branch
          %258 = sbr.rel (%p256) target = $region20
        $region19: #{tpu_custom_call.1} parent=11 // pred_region
          %260 = vsyncadd [#allocation13], 0
          %s261 = sshll.u32 %s6, 4
          %s262 = int_to_ptr.hbm [resolvable:$true] %s261
          %s263 = sshll.u32 [#allocation12], 4
          %s264 = int_to_ptr.vmem [resolvable:$true] %s263
          %269 = dma.hbm_to_vmem [thread:$0]  %s262, 8192, %s264, [#allocation13], 256, 256, 16
        $region20: #{tpu_custom_call.1} parent=11 // pred_fallthru
          _
      $region12: #{tpu_custom_call.1} parent=5 // pred_fallthru
        _
      %p270 = scmp.lt.s32.totalorder %s26, 4
      // Predicated region
      $region21: #{tpu_custom_call.1} parent=5 // pred_check
        %p271 = pneg %p270
      $region22: #{tpu_custom_call.1} parent=5 // pred_check_branch
        %273 = sbr.rel (%p271) target = $region24
      $region23: #{tpu_custom_call.1} parent=5 // pred_region
        // Predicated region
        $region25: #{tpu_custom_call.1} parent=23 // pred_check
          %p274 = pneg %p58
        $region26: #{tpu_custom_call.1} parent=23 // pred_check_branch
          %276 = sbr.rel (%p274) target = $region28
        $region27: #{tpu_custom_call.1} parent=23 // pred_region
          %s277 = sand.u32 %s48, 1
          %s278 = scalar_lea.sflag [#allocation4], %s277
          %s279 = sand.u32 %s48, 1
          %s280 = smul.addr %s279, 256
          %s281 = scalar_lea.vmem [#allocation3], %s280
          %s282 = smul.u32 16, %s33
          %284 = vsyncadd %s278, 0
          %s285 = smul.addr %s282, 2
          %s286 = smul.addr %s285, 8
          %s287 = scalar_lea.hbm %s0, %s286
          %s288 = sshll.u32 %s287, 4
          %s289 = int_to_ptr.hbm [resolvable:$true] %s288
          %s290 = sshll.u32 %s281, 4
          %s291 = int_to_ptr.vmem [resolvable:$true] %s290
          %296 = dma.hbm_to_vmem [thread:$0]  %s289, 4096, %s291, %s278, 256, 256, 16
        $region28: #{tpu_custom_call.1} parent=23 // pred_fallthru
          _
        // Predicated region
        $region29: #{tpu_custom_call.1} parent=23 // pred_check
          %p297 = pneg %p84
        $region30: #{tpu_custom_call.1} parent=23 // pred_check_branch
          %299 = sbr.rel (%p297) target = $region32
        $region31: #{tpu_custom_call.1} parent=23 // pred_region
          %s300 = sand.u32 %s26, 1
          %s301 = scalar_lea.sflag [#allocation7], %s300
          %s302 = sand.u32 %s74, 1
          %s303 = smul.addr %s302, 256
          %s304 = scalar_lea.vmem [#allocation6], %s303
          %s305 = smul.u32 16, %s34
          %307 = vsyncadd %s301, 0
          %s308 = smul.addr %s305, 2
          %s309 = smul.addr %s308, 8
          %s310 = scalar_lea.hbm %s1, %s309
          %s311 = sshll.u32 %s310, 4
          %s312 = int_to_ptr.hbm [resolvable:$true] %s311
          %s313 = sshll.u32 %s304, 4
          %s314 = int_to_ptr.vmem [resolvable:$true] %s313
          %319 = dma.hbm_to_vmem [thread:$0]  %s312, 4096, %s314, %s301, 256, 256, 16
        $region32: #{tpu_custom_call.1} parent=23 // pred_fallthru
          _
        // Predicated region
        $region33: #{tpu_custom_call.1} parent=23 // pred_check
          %p320 = pneg %p110
        $region34: #{tpu_custom_call.1} parent=23 // pred_check_branch
          %322 = sbr.rel (%p320) target = $region36
        $region35: #{tpu_custom_call.1} parent=23 // pred_region
          %s323 = sand.u32 %s26, 1
          %s324 = scalar_lea.sflag [#allocation7], %s323
          %s325 = sand.u32 %s100, 1
          %s326 = smul.addr %s325, 256
          %s327 = scalar_lea.vmem [#allocation8], %s326
          %s328 = smul.u32 16, %s33
          %330 = vsyncadd %s324, 0
          %s331 = smul.addr %s328, 2
          %s332 = smul.addr %s331, 8
          %s333 = scalar_lea.hbm %s2, %s332
          %s334 = sshll.u32 %s333, 4
          %s335 = int_to_ptr.hbm [resolvable:$true] %s334
          %s336 = sshll.u32 %s327, 4
          %s337 = int_to_ptr.vmem [resolvable:$true] %s336
          %342 = dma.hbm_to_vmem [thread:$0]  %s335, 4096, %s337, %s324, 256, 256, 16
        $region36: #{tpu_custom_call.1} parent=23 // pred_fallthru
          _
        // Predicated region
        $region37: #{tpu_custom_call.1} parent=23 // pred_check
          %p343 = pneg %p138
        $region38: #{tpu_custom_call.1} parent=23 // pred_check_branch
          %345 = sbr.rel (%p343) target = $region40
        $region39: #{tpu_custom_call.1} parent=23 // pred_region
          %s346 = sand.u32 %s26, 1
          %s347 = scalar_lea.sflag [#allocation10], %s346
          %s348 = sand.u32 %s128, 1
          %s349 = smul.addr %s348, 128
          %s350 = scalar_lea.vmem [#allocation9], %s349
          %s351 = smul.u32 16, %s33
          %353 = vsyncadd %s347, 0
          %s354 = smul.addr %s351, 2
          %s355 = sadd.s32 %s34, %s354
          %s356 = smul.addr %s355, 8
          %s357 = scalar_lea.hbm %s3, %s356
          %s358 = sshll.u32 %s357, 4
          %s359 = int_to_ptr.hbm [resolvable:$true] %s358
          %s360 = sshll.u32 %s350, 4
          %s361 = int_to_ptr.vmem [resolvable:$true] %s360
          %366 = dma.hbm_to_vmem [thread:$0]  %s359, 2048, %s361, %s347, 256, 128, 8
        $region40: #{tpu_custom_call.1} parent=23 // pred_fallthru
          _
        // Predicated region
        $region41: #{tpu_custom_call.1} parent=23 // pred_check
          %p367 = pneg %p164
        $region42: #{tpu_custom_call.1} parent=23 // pred_check_branch
          %369 = sbr.rel (%p367) target = $region44
        $region43: #{tpu_custom_call.1} parent=23 // pred_region
          %s370 = sand.u32 %s26, 1
          %s371 = scalar_lea.sflag [#allocation10], %s370
          %s372 = sand.u32 %s154, 1
          %s373 = smul.addr %s372, 128
          %s374 = scalar_lea.vmem [#allocation11], %s373
          %s375 = smul.u32 16, %s33
          %377 = vsyncadd %s371, 0
          %s378 = smul.addr %s375, 8
          %s379 = scalar_lea.hbm %s4, %s378
          %s380 = sshll.u32 %s379, 4
          %s381 = int_to_ptr.hbm [resolvable:$true] %s380
          %s382 = sshll.u32 %s374, 4
          %s383 = int_to_ptr.vmem [resolvable:$true] %s382
          %388 = dma.hbm_to_vmem [thread:$0]  %s381, 2048, %s383, %s371, 128, 128, 8
        $region44: #{tpu_custom_call.1} parent=23 // pred_fallthru
          _
      $region24: #{tpu_custom_call.1} parent=5 // pred_fallthru
        _
      %p389 = scmp.le.s32.totalorder 1, %s26
      %p390 = scmp.lt.s32.totalorder %s26, 5
      %p391 = pnand %p389, %p390
      %p392 = pneg %p391
      // Predicated region
      $region45: #{tpu_custom_call.1} parent=5 // pred_check
        _
      $region46: #{tpu_custom_call.1} parent=5 // pred_check_branch
        %394 = sbr.rel (%p391) target = $region48
      $region47: #{tpu_custom_call.1} parent=5 // pred_region
        %s395 = ssub.s32 %s26, 1
        %s396 = sand.u32 %s51, 1
        %s397 = scalar_lea.sflag [#allocation4], %s396
        %s398 = sand.u32 %s51, 1
        %s399 = smul.addr %s398, 256
        %s400 = scalar_lea.vmem [#allocation3], %s399
        // Predicated region
        $region49: #{tpu_custom_call.1} parent=47 // pred_check
          %p401 = pneg %p64
        $region50: #{tpu_custom_call.1} parent=47 // pred_check_branch
          %403 = sbr.rel (%p401) target = $region52
        $region51: #{tpu_custom_call.1} parent=47 // pred_region
          %405 = dma.done %s397, 4096
        $region52: #{tpu_custom_call.1} parent=47 // pred_fallthru
          _
        %s406 = sand.u32 %s31, 1
        %s407 = scalar_lea.sflag [#allocation7], %s406
        %s408 = sand.u32 %s77, 1
        %s409 = smul.addr %s408, 256
        %s410 = scalar_lea.vmem [#allocation6], %s409
        // Predicated region
        $region53: #{tpu_custom_call.1} parent=47 // pred_check
          %p411 = pneg %p90
        $region54: #{tpu_custom_call.1} parent=47 // pred_check_branch
          %413 = sbr.rel (%p411) target = $region56
        $region55: #{tpu_custom_call.1} parent=47 // pred_region
          %415 = dma.done %s407, 4096
        $region56: #{tpu_custom_call.1} parent=47 // pred_fallthru
          _
        %s416 = sand.u32 %s31, 1
        %s417 = scalar_lea.sflag [#allocation7], %s416
        %s418 = sand.u32 %s103, 1
        %s419 = smul.addr %s418, 256
        %s420 = scalar_lea.vmem [#allocation8], %s419
        // Predicated region
        $region57: #{tpu_custom_call.1} parent=47 // pred_check
          %p421 = pneg %p116
        $region58: #{tpu_custom_call.1} parent=47 // pred_check_branch
          %423 = sbr.rel (%p421) target = $region60
        $region59: #{tpu_custom_call.1} parent=47 // pred_region
          %425 = dma.done %s417, 4096
        $region60: #{tpu_custom_call.1} parent=47 // pred_fallthru
          _
        %s426 = sand.u32 %s31, 1
        %s427 = scalar_lea.sflag [#allocation10], %s426
        %s428 = sand.u32 %s131, 1
        %s429 = smul.addr %s428, 128
        %s430 = scalar_lea.vmem [#allocation9], %s429
        // Predicated region
        $region61: #{tpu_custom_call.1} parent=47 // pred_check
          %p431 = pneg %p144
        $region62: #{tpu_custom_call.1} parent=47 // pred_check_branch
          %433 = sbr.rel (%p431) target = $region64
        $region63: #{tpu_custom_call.1} parent=47 // pred_region
          %435 = dma.done %s427, 2048
        $region64: #{tpu_custom_call.1} parent=47 // pred_fallthru
          _
        %s436 = sand.u32 %s31, 1
        %s437 = scalar_lea.sflag [#allocation10], %s436
        %s438 = sand.u32 %s157, 1
        %s439 = smul.addr %s438, 128
        %s440 = scalar_lea.vmem [#allocation11], %s439
        // Predicated region
        $region65: #{tpu_custom_call.1} parent=47 // pred_check
          %p441 = pneg %p170
        $region66: #{tpu_custom_call.1} parent=47 // pred_check_branch
          %443 = sbr.rel (%p441) target = $region68
        $region67: #{tpu_custom_call.1} parent=47 // pred_region
          %445 = dma.done %s437, 2048
        $region68: #{tpu_custom_call.1} parent=47 // pred_fallthru
          _
        // Predicated region
        $region69: #{tpu_custom_call.1} parent=47 // pred_check
          %p446 = pneg %p212
        $region70: #{tpu_custom_call.1} parent=47 // pred_check_branch
          %448 = sbr.rel (%p446) target = $region72
        $region71: #{tpu_custom_call.1} parent=47 // pred_region
          %450 = dma.done [#allocation13], 8192
        $region72: #{tpu_custom_call.1} parent=47 // pred_fallthru
          _
        %s451 = sand.u32 %s51, 1
        %s452 = scalar_lea.sflag [#allocation4], %s451
        %s453 = sand.u32 %s51, 1
        %s454 = smul.addr %s453, 256
        %s455 = scalar_lea.vmem [#allocation3], %s454
        %p456 = pneg %p64
        %p457 = pneg %p61
        %s458 = sand.u32 %s31, 1
        %s459 = scalar_lea.sflag [#allocation7], %s458
        %s460 = sand.u32 %s77, 1
        %s461 = smul.addr %s460, 256
        %s462 = scalar_lea.vmem [#allocation6], %s461
        %p463 = pneg %p90
        %p464 = pneg %p87
        %s465 = sand.u32 %s31, 1
        %s466 = scalar_lea.sflag [#allocation7], %s465
        %s467 = sand.u32 %s103, 1
        %s468 = smul.addr %s467, 256
        %s469 = scalar_lea.vmem [#allocation8], %s468
        %p470 = pneg %p116
        %p471 = pneg %p113
        %s472 = sand.u32 %s31, 1
        %s473 = scalar_lea.sflag [#allocation10], %s472
        %s474 = sand.u32 %s131, 1
        %s475 = smul.addr %s474, 128
        %s476 = scalar_lea.vmem [#allocation9], %s475
        %p477 = pneg %p144
        %p478 = pneg %p141
        %s479 = sand.u32 %s31, 1
        %s480 = scalar_lea.sflag [#allocation10], %s479
        %s481 = sand.u32 %s157, 1
        %s482 = smul.addr %s481, 128
        %s483 = scalar_lea.vmem [#allocation11], %s482
        %p484 = pneg %p170
        %p485 = pneg %p167
        %p486 = pneg %p191
        %p487 = pneg %p188
        %p488 = pneg %p212
        %p489 = pneg %p209
        %p490 = pneg %p238
        %p491 = pneg %p235
        %s492 = sand.u32 %s225, 1
        %s493 = scalar_lea.sflag [#allocation5], %s492
        %s494 = sand.u32 %s225, 1
        %s495 = smul.addr %s494, 256
        %s496 = scalar_lea.vmem [#allocation14], %s495
        %s497 = smul.u32 16, %s35
        %s498 = smul.u32 16, %s36
        %s499 = smul.u32 16, %s35
        %s500 = smul.u32 16, %s35
        %s501 = smul.u32 16, %s35
        %s502 = smul.u32 16, %s35
        %p503 = scmp.eq.s32.totalorder %s36, 0
        // Predicated region
        $region73: #{tpu_custom_call.1} parent=47 // pred_check
          %p504 = pneg %p503
        $region74: #{tpu_custom_call.1} parent=47 // pred_check_branch
          %506 = sbr.rel (%p504) target = $region76
        $region75: #{tpu_custom_call.1} parent=47 // pred_region
          %507 = vst [vmem:[#allocation2] sm:$0xff] 0.0
          %508 = vst [vmem:[#allocation2 + $0x8] sm:$0xff] 0.0
          %509 = vst [vmem:[#allocation2 + $0x10] sm:$0xff] 0.0
          %510 = vst [vmem:[#allocation2 + $0x18] sm:$0xff] 0.0
          %511 = vst [vmem:[#allocation2 + $0x20] sm:$0xff] 0.0
          %512 = vst [vmem:[#allocation2 + $0x28] sm:$0xff] 0.0
          %513 = vst [vmem:[#allocation2 + $0x30] sm:$0xff] 0.0
          %514 = vst [vmem:[#allocation2 + $0x38] sm:$0xff] 0.0
          %515 = vst [vmem:[#allocation2 + $0x40] sm:$0xff] 0.0
          %516 = vst [vmem:[#allocation2 + $0x48] sm:$0xff] 0.0
          %517 = vst [vmem:[#allocation2 + $0x50] sm:$0xff] 0.0
          %518 = vst [vmem:[#allocation2 + $0x58] sm:$0xff] 0.0
          %519 = vst [vmem:[#allocation2 + $0x60] sm:$0xff] 0.0
          %520 = vst [vmem:[#allocation2 + $0x68] sm:$0xff] 0.0
          %521 = vst [vmem:[#allocation2 + $0x70] sm:$0xff] 0.0
          %522 = vst [vmem:[#allocation2 + $0x78] sm:$0xff] 0.0
          %523 = vst [vmem:[#allocation2 + $0x80] sm:$0xff] 0.0
          %524 = vst [vmem:[#allocation2 + $0x88] sm:$0xff] 0.0
          %525 = vst [vmem:[#allocation2 + $0x90] sm:$0xff] 0.0
          %526 = vst [vmem:[#allocation2 + $0x98] sm:$0xff] 0.0
          %527 = vst [vmem:[#allocation2 + $0xa0] sm:$0xff] 0.0
          %528 = vst [vmem:[#allocation2 + $0xa8] sm:$0xff] 0.0
          %529 = vst [vmem:[#allocation2 + $0xb0] sm:$0xff] 0.0
          %530 = vst [vmem:[#allocation2 + $0xb8] sm:$0xff] 0.0
          %531 = vst [vmem:[#allocation2 + $0xc0] sm:$0xff] 0.0
          %532 = vst [vmem:[#allocation2 + $0xc8] sm:$0xff] 0.0
          %533 = vst [vmem:[#allocation2 + $0xd0] sm:$0xff] 0.0
          %534 = vst [vmem:[#allocation2 + $0xd8] sm:$0xff] 0.0
          %535 = vst [vmem:[#allocation2 + $0xe0] sm:$0xff] 0.0
          %536 = vst [vmem:[#allocation2 + $0xe8] sm:$0xff] 0.0
          %537 = vst [vmem:[#allocation2 + $0xf0] sm:$0xff] 0.0
          %538 = vst [vmem:[#allocation2 + $0xf8] sm:$0xff] 0.0
        $region76: #{tpu_custom_call.1} parent=47 // pred_fallthru
          _
        %v539 = vld [vmem:[#allocation2] sm:$0xff]
        %v540 = vld [vmem:[#allocation2 + $0x8] sm:$0xff]
        %v541 = vld [vmem:[#allocation2 + $0x10] sm:$0xff]
        %v542 = vld [vmem:[#allocation2 + $0x18] sm:$0xff]
        %v543 = vld [vmem:[#allocation2 + $0x20] sm:$0xff]
        %v544 = vld [vmem:[#allocation2 + $0x28] sm:$0xff]
        %v545 = vld [vmem:[#allocation2 + $0x30] sm:$0xff]
        %v546 = vld [vmem:[#allocation2 + $0x38] sm:$0xff]
        %v547 = vld [vmem:[#allocation2 + $0x40] sm:$0xff]
        %v548 = vld [vmem:[#allocation2 + $0x48] sm:$0xff]
        %v549 = vld [vmem:[#allocation2 + $0x50] sm:$0xff]
        %v550 = vld [vmem:[#allocation2 + $0x58] sm:$0xff]
        %v551 = vld [vmem:[#allocation2 + $0x60] sm:$0xff]
        %v552 = vld [vmem:[#allocation2 + $0x68] sm:$0xff]
        %v553 = vld [vmem:[#allocation2 + $0x70] sm:$0xff]
        %v554 = vld [vmem:[#allocation2 + $0x78] sm:$0xff]
        %v555 = vld [vmem:[#allocation2 + $0x80] sm:$0xff]
        %v556 = vld [vmem:[#allocation2 + $0x88] sm:$0xff]
        %v557 = vld [vmem:[#allocation2 + $0x90] sm:$0xff]
        %v558 = vld [vmem:[#allocation2 + $0x98] sm:$0xff]
        %v559 = vld [vmem:[#allocation2 + $0xa0] sm:$0xff]
        %v560 = vld [vmem:[#allocation2 + $0xa8] sm:$0xff]
        %v561 = vld [vmem:[#allocation2 + $0xb0] sm:$0xff]
        %v562 = vld [vmem:[#allocation2 + $0xb8] sm:$0xff]
        %v563 = vld [vmem:[#allocation2 + $0xc0] sm:$0xff]
        %v564 = vld [vmem:[#allocation2 + $0xc8] sm:$0xff]
        %v565 = vld [vmem:[#allocation2 + $0xd0] sm:$0xff]
        %v566 = vld [vmem:[#allocation2 + $0xd8] sm:$0xff]
        %v567 = vld [vmem:[#allocation2 + $0xe0] sm:$0xff]
        %v568 = vld [vmem:[#allocation2 + $0xe8] sm:$0xff]
        %v569 = vld [vmem:[#allocation2 + $0xf0] sm:$0xff]
        %v570 = vld [vmem:[#allocation2 + $0xf8] sm:$0xff]
        %v571 = vld [vmem:[%s430] sm:$0xff]
        %v572 = vld [vmem:[%s430 + $0x8] sm:$0xff]
        %v573 = vld [vmem:[%s430 + $0x10] sm:$0xff]
        %v574 = vld [vmem:[%s430 + $0x18] sm:$0xff]
        %v575 = vld [vmem:[%s430 + $0x20] sm:$0xff]
        %v576 = vld [vmem:[%s430 + $0x28] sm:$0xff]
        %v577 = vld [vmem:[%s430 + $0x30] sm:$0xff]
        %v578 = vld [vmem:[%s430 + $0x38] sm:$0xff]
        %v579 = vld [vmem:[%s430 + $0x40] sm:$0xff]
        %v580 = vld [vmem:[%s430 + $0x48] sm:$0xff]
        %v581 = vld [vmem:[%s430 + $0x50] sm:$0xff]
        %v582 = vld [vmem:[%s430 + $0x58] sm:$0xff]
        %v583 = vld [vmem:[%s430 + $0x60] sm:$0xff]
        %v584 = vld [vmem:[%s430 + $0x68] sm:$0xff]
        %v585 = vld [vmem:[%s430 + $0x70] sm:$0xff]
        %v586 = vld [vmem:[%s430 + $0x78] sm:$0xff]
        %v587 = vld [vmem:[%s410] sm:$0xff]
        %v588 = vld [vmem:[%s410 + $0x8] sm:$0xff]
        %v589 = vld [vmem:[%s410 + $0x10] sm:$0xff]
        %v590 = vld [vmem:[%s410 + $0x18] sm:$0xff]
        %v591 = vld [vmem:[%s410 + $0x20] sm:$0xff]
        %v592 = vld [vmem:[%s410 + $0x28] sm:$0xff]
        %v593 = vld [vmem:[%s410 + $0x30] sm:$0xff]
        %v594 = vld [vmem:[%s410 + $0x38] sm:$0xff]
        %v595 = vld [vmem:[%s410 + $0x40] sm:$0xff]
        %v596 = vld [vmem:[%s410 + $0x48] sm:$0xff]
        %v597 = vld [vmem:[%s410 + $0x50] sm:$0xff]
        %v598 = vld [vmem:[%s410 + $0x58] sm:$0xff]
        %v599 = vld [vmem:[%s410 + $0x60] sm:$0xff]
        %v600 = vld [vmem:[%s410 + $0x68] sm:$0xff]
        %v601 = vld [vmem:[%s410 + $0x70] sm:$0xff]
        %v602 = vld [vmem:[%s410 + $0x78] sm:$0xff]
        %v603 = vld [vmem:[%s410 + $0x80] sm:$0xff]
        %v604 = vld [vmem:[%s410 + $0x88] sm:$0xff]
        %v605 = vld [vmem:[%s410 + $0x90] sm:$0xff]
        %v606 = vld [vmem:[%s410 + $0x98] sm:$0xff]
        %v607 = vld [vmem:[%s410 + $0xa0] sm:$0xff]
        %v608 = vld [vmem:[%s410 + $0xa8] sm:$0xff]
        %v609 = vld [vmem:[%s410 + $0xb0] sm:$0xff]
        %v610 = vld [vmem:[%s410 + $0xb8] sm:$0xff]
        %v611 = vld [vmem:[%s410 + $0xc0] sm:$0xff]
        %v612 = vld [vmem:[%s410 + $0xc8] sm:$0xff]
        %v613 = vld [vmem:[%s410 + $0xd0] sm:$0xff]
        %v614 = vld [vmem:[%s410 + $0xd8] sm:$0xff]
        %v615 = vld [vmem:[%s410 + $0xe0] sm:$0xff]
        %v616 = vld [vmem:[%s410 + $0xe8] sm:$0xff]
        %v617 = vld [vmem:[%s410 + $0xf0] sm:$0xff]
        %v618 = vld [vmem:[%s410 + $0xf8] sm:$0xff]
        %619 = vmatpush.msra.mxu0 %v617
        %620 = vmatpush.msra.mxu0 %v615
        %621 = vmatpush.msra.mxu0 %v613
        %622 = vmatpush.msra.mxu0 %v611
        %623 = vmatpush.msra.mxu0 %v609
        %624 = vmatpush.msra.mxu0 %v607
        %625 = vmatpush.msra.mxu0 %v605
        %626 = vmatpush.msra.mxu0 %v603
        %627 = vmatpush.msra.mxu0 %v601
        %628 = vmatpush.msra.mxu0 %v599
        %629 = vmatpush.msra.mxu0 %v597
        %630 = vmatpush.msra.mxu0 %v595
        %631 = vmatpush.msra.mxu0 %v593
        %632 = vmatpush.msra.mxu0 %v591
        %633 = vmatpush.msra.mxu0 %v589
        %634 = vmatpush.msra.mxu0 %v587
        %635 = vmatmul.f32.gmra.mxu0 %v571
        %v636 = vpop.f32.mrf.mxu0
        %v637 = vadd.f32 0.0, %v636
        %638 = vmatmul.f32.gmra.mxu0 %v572
        %v639 = vpop.f32.mrf.mxu0
        %v640 = vadd.f32 0.0, %v639
        %641 = vmatmul.f32.gmra.mxu0 %v573
        %v642 = vpop.f32.mrf.mxu0
        %v643 = vadd.f32 0.0, %v642
        %644 = vmatmul.f32.gmra.mxu0 %v574
        %v645 = vpop.f32.mrf.mxu0
        %v646 = vadd.f32 0.0, %v645
        %647 = vmatmul.f32.gmra.mxu0 %v575
        %v648 = vpop.f32.mrf.mxu0
        %v649 = vadd.f32 0.0, %v648
        %650 = vmatmul.f32.gmra.mxu0 %v576
        %v651 = vpop.f32.mrf.mxu0
        %v652 = vadd.f32 0.0, %v651
        %653 = vmatmul.f32.gmra.mxu0 %v577
        %v654 = vpop.f32.mrf.mxu0
        %v655 = vadd.f32 0.0, %v654
        %656 = vmatmul.f32.gmra.mxu0 %v578
        %v657 = vpop.f32.mrf.mxu0
        %v658 = vadd.f32 0.0, %v657
        %659 = vmatmul.f32.gmra.mxu0 %v579
        %v660 = vpop.f32.mrf.mxu0
        %v661 = vadd.f32 0.0, %v660
        %662 = vmatmul.f32.gmra.mxu0 %v580
        %v663 = vpop.f32.mrf.mxu0
        %v664 = vadd.f32 0.0, %v663
        %665 = vmatmul.f32.gmra.mxu0 %v581
        %v666 = vpop.f32.mrf.mxu0
        %v667 = vadd.f32 0.0, %v666
        %668 = vmatmul.f32.gmra.mxu0 %v582
        %v669 = vpop.f32.mrf.mxu0
        %v670 = vadd.f32 0.0, %v669
        %671 = vmatmul.f32.gmra.mxu0 %v583
        %v672 = vpop.f32.mrf.mxu0
        %v673 = vadd.f32 0.0, %v672
        %674 = vmatmul.f32.gmra.mxu0 %v584
        %v675 = vpop.f32.mrf.mxu0
        %v676 = vadd.f32 0.0, %v675
        %677 = vmatmul.f32.gmra.mxu0 %v585
        %v678 = vpop.f32.mrf.mxu0
        %v679 = vadd.f32 0.0, %v678
        %680 = vmatmul.f32.gmra.mxu0 %v586
        %v681 = vpop.f32.mrf.mxu0
        %v682 = vadd.f32 0.0, %v681
        %683 = vdwg.mxu0
        %684 = vmatpush.msra.mxu0 %v618
        %685 = vmatpush.msra.mxu0 %v616
        %686 = vmatpush.msra.mxu0 %v614
        %687 = vmatpush.msra.mxu0 %v612
        %688 = vmatpush.msra.mxu0 %v610
        %689 = vmatpush.msra.mxu0 %v608
        %690 = vmatpush.msra.mxu0 %v606
        %691 = vmatpush.msra.mxu0 %v604
        %692 = vmatpush.msra.mxu0 %v602
        %693 = vmatpush.msra.mxu0 %v600
        %694 = vmatpush.msra.mxu0 %v598
        %695 = vmatpush.msra.mxu0 %v596
        %696 = vmatpush.msra.mxu0 %v594
        %697 = vmatpush.msra.mxu0 %v592
        %698 = vmatpush.msra.mxu0 %v590
        %699 = vmatpush.msra.mxu0 %v588
        %700 = vmatmul.f32.gmra.mxu0 %v571
        %v701 = vpop.f32.mrf.mxu0
        %v702 = vadd.f32 0.0, %v701
        %703 = vmatmul.f32.gmra.mxu0 %v572
        %v704 = vpop.f32.mrf.mxu0
        %v705 = vadd.f32 0.0, %v704
        %706 = vmatmul.f32.gmra.mxu0 %v573
        %v707 = vpop.f32.mrf.mxu0
        %v708 = vadd.f32 0.0, %v707
        %709 = vmatmul.f32.gmra.mxu0 %v574
        %v710 = vpop.f32.mrf.mxu0
        %v711 = vadd.f32 0.0, %v710
        %712 = vmatmul.f32.gmra.mxu0 %v575
        %v713 = vpop.f32.mrf.mxu0
        %v714 = vadd.f32 0.0, %v713
        %715 = vmatmul.f32.gmra.mxu0 %v576
        %v716 = vpop.f32.mrf.mxu0
        %v717 = vadd.f32 0.0, %v716
        %718 = vmatmul.f32.gmra.mxu0 %v577
        %v719 = vpop.f32.mrf.mxu0
        %v720 = vadd.f32 0.0, %v719
        %721 = vmatmul.f32.gmra.mxu0 %v578
        %v722 = vpop.f32.mrf.mxu0
        %v723 = vadd.f32 0.0, %v722
        %724 = vmatmul.f32.gmra.mxu0 %v579
        %v725 = vpop.f32.mrf.mxu0
        %v726 = vadd.f32 0.0, %v725
        %727 = vmatmul.f32.gmra.mxu0 %v580
        %v728 = vpop.f32.mrf.mxu0
        %v729 = vadd.f32 0.0, %v728
        %730 = vmatmul.f32.gmra.mxu0 %v581
        %v731 = vpop.f32.mrf.mxu0
        %v732 = vadd.f32 0.0, %v731
        %733 = vmatmul.f32.gmra.mxu0 %v582
        %v734 = vpop.f32.mrf.mxu0
        %v735 = vadd.f32 0.0, %v734
        %736 = vmatmul.f32.gmra.mxu0 %v583
        %v737 = vpop.f32.mrf.mxu0
        %v738 = vadd.f32 0.0, %v737
        %739 = vmatmul.f32.gmra.mxu0 %v584
        %v740 = vpop.f32.mrf.mxu0
        %v741 = vadd.f32 0.0, %v740
        %742 = vmatmul.f32.gmra.mxu0 %v585
        %v743 = vpop.f32.mrf.mxu0
        %v744 = vadd.f32 0.0, %v743
        %745 = vmatmul.f32.gmra.mxu0 %v586
        %v746 = vpop.f32.mrf.mxu0
        %v747 = vadd.f32 0.0, %v746
        %748 = vdwg.mxu0
        %v749 = vadd.f32 %v539, %v637
        %v750 = vadd.f32 %v540, %v702
        %v751 = vadd.f32 %v541, %v640
        %v752 = vadd.f32 %v542, %v705
        %v753 = vadd.f32 %v543, %v643
        %v754 = vadd.f32 %v544, %v708
        %v755 = vadd.f32 %v545, %v646
        %v756 = vadd.f32 %v546, %v711
        %v757 = vadd.f32 %v547, %v649
        %v758 = vadd.f32 %v548, %v714
        %v759 = vadd.f32 %v549, %v652
        %v760 = vadd.f32 %v550, %v717
        %v761 = vadd.f32 %v551, %v655
        %v762 = vadd.f32 %v552, %v720
        %v763 = vadd.f32 %v553, %v658
        %v764 = vadd.f32 %v554, %v723
        %v765 = vadd.f32 %v555, %v661
        %v766 = vadd.f32 %v556, %v726
        %v767 = vadd.f32 %v557, %v664
        %v768 = vadd.f32 %v558, %v729
        %v769 = vadd.f32 %v559, %v667
        %v770 = vadd.f32 %v560, %v732
        %v771 = vadd.f32 %v561, %v670
        %v772 = vadd.f32 %v562, %v735
        %v773 = vadd.f32 %v563, %v673
        %v774 = vadd.f32 %v564, %v738
        %v775 = vadd.f32 %v565, %v676
        %v776 = vadd.f32 %v566, %v741
        %v777 = vadd.f32 %v567, %v679
        %v778 = vadd.f32 %v568, %v744
        %v779 = vadd.f32 %v569, %v682
        %v780 = vadd.f32 %v570, %v747
        %781 = vst [vmem:[#allocation2] sm:$0xff] %v749
        %782 = vst [vmem:[#allocation2 + $0x8] sm:$0xff] %v750
        %783 = vst [vmem:[#allocation2 + $0x10] sm:$0xff] %v751
        %784 = vst [vmem:[#allocation2 + $0x18] sm:$0xff] %v752
        %785 = vst [vmem:[#allocation2 + $0x20] sm:$0xff] %v753
        %786 = vst [vmem:[#allocation2 + $0x28] sm:$0xff] %v754
        %787 = vst [vmem:[#allocation2 + $0x30] sm:$0xff] %v755
        %788 = vst [vmem:[#allocation2 + $0x38] sm:$0xff] %v756
        %789 = vst [vmem:[#allocation2 + $0x40] sm:$0xff] %v757
        %790 = vst [vmem:[#allocation2 + $0x48] sm:$0xff] %v758
        %791 = vst [vmem:[#allocation2 + $0x50] sm:$0xff] %v759
        %792 = vst [vmem:[#allocation2 + $0x58] sm:$0xff] %v760
        %793 = vst [vmem:[#allocation2 + $0x60] sm:$0xff] %v761
        %794 = vst [vmem:[#allocation2 + $0x68] sm:$0xff] %v762
        %795 = vst [vmem:[#allocation2 + $0x70] sm:$0xff] %v763
        %796 = vst [vmem:[#allocation2 + $0x78] sm:$0xff] %v764
        %797 = vst [vmem:[#allocation2 + $0x80] sm:$0xff] %v765
        %798 = vst [vmem:[#allocation2 + $0x88] sm:$0xff] %v766
        %799 = vst [vmem:[#allocation2 + $0x90] sm:$0xff] %v767
        %800 = vst [vmem:[#allocation2 + $0x98] sm:$0xff] %v768
        %801 = vst [vmem:[#allocation2 + $0xa0] sm:$0xff] %v769
        %802 = vst [vmem:[#allocation2 + $0xa8] sm:$0xff] %v770
        %803 = vst [vmem:[#allocation2 + $0xb0] sm:$0xff] %v771
        %804 = vst [vmem:[#allocation2 + $0xb8] sm:$0xff] %v772
        %805 = vst [vmem:[#allocation2 + $0xc0] sm:$0xff] %v773
        %806 = vst [vmem:[#allocation2 + $0xc8] sm:$0xff] %v774
        %807 = vst [vmem:[#allocation2 + $0xd0] sm:$0xff] %v775
        %808 = vst [vmem:[#allocation2 + $0xd8] sm:$0xff] %v776
        %809 = vst [vmem:[#allocation2 + $0xe0] sm:$0xff] %v777
        %810 = vst [vmem:[#allocation2 + $0xe8] sm:$0xff] %v778
        %811 = vst [vmem:[#allocation2 + $0xf0] sm:$0xff] %v779
        %812 = vst [vmem:[#allocation2 + $0xf8] sm:$0xff] %v780
        %p813 = scmp.eq.s32.totalorder %s36, 1
        // Predicated region
        $region77: #{tpu_custom_call.1} parent=47 // pred_check
          %p814 = pneg %p813
        $region78: #{tpu_custom_call.1} parent=47 // pred_check_branch
          %816 = sbr.rel (%p814) target = $region80
        $region79: #{tpu_custom_call.1} parent=47 // pred_region
          %v817 = vld [vmem:[%s400] sm:$0xff]
          %v818 = vld [vmem:[%s400 + $0x8] sm:$0xff]
          %v819 = vld [vmem:[%s400 + $0x10] sm:$0xff]
          %v820 = vld [vmem:[%s400 + $0x18] sm:$0xff]
          %v821 = vld [vmem:[%s400 + $0x20] sm:$0xff]
          %v822 = vld [vmem:[%s400 + $0x28] sm:$0xff]
          %v823 = vld [vmem:[%s400 + $0x30] sm:$0xff]
          %v824 = vld [vmem:[%s400 + $0x38] sm:$0xff]
          %v825 = vld [vmem:[%s400 + $0x40] sm:$0xff]
          %v826 = vld [vmem:[%s400 + $0x48] sm:$0xff]
          %v827 = vld [vmem:[%s400 + $0x50] sm:$0xff]
          %v828 = vld [vmem:[%s400 + $0x58] sm:$0xff]
          %v829 = vld [vmem:[%s400 + $0x60] sm:$0xff]
          %v830 = vld [vmem:[%s400 + $0x68] sm:$0xff]
          %v831 = vld [vmem:[%s400 + $0x70] sm:$0xff]
          %v832 = vld [vmem:[%s400 + $0x78] sm:$0xff]
          %v833 = vld [vmem:[%s400 + $0x80] sm:$0xff]
          %v834 = vld [vmem:[%s400 + $0x88] sm:$0xff]
          %v835 = vld [vmem:[%s400 + $0x90] sm:$0xff]
          %v836 = vld [vmem:[%s400 + $0x98] sm:$0xff]
          %v837 = vld [vmem:[%s400 + $0xa0] sm:$0xff]
          %v838 = vld [vmem:[%s400 + $0xa8] sm:$0xff]
          %v839 = vld [vmem:[%s400 + $0xb0] sm:$0xff]
          %v840 = vld [vmem:[%s400 + $0xb8] sm:$0xff]
          %v841 = vld [vmem:[%s400 + $0xc0] sm:$0xff]
          %v842 = vld [vmem:[%s400 + $0xc8] sm:$0xff]
          %v843 = vld [vmem:[%s400 + $0xd0] sm:$0xff]
          %v844 = vld [vmem:[%s400 + $0xd8] sm:$0xff]
          %v845 = vld [vmem:[%s400 + $0xe0] sm:$0xff]
          %v846 = vld [vmem:[%s400 + $0xe8] sm:$0xff]
          %v847 = vld [vmem:[%s400 + $0xf0] sm:$0xff]
          %v848 = vld [vmem:[%s400 + $0xf8] sm:$0xff]
          %v849 = vld [vmem:[%s440] sm:$0xff]
          %v850 = vld [vmem:[%s440 + $0x8] sm:$0xff]
          %v851 = vld [vmem:[%s440 + $0x10] sm:$0xff]
          %v852 = vld [vmem:[%s440 + $0x18] sm:$0xff]
          %v853 = vld [vmem:[%s440 + $0x20] sm:$0xff]
          %v854 = vld [vmem:[%s440 + $0x28] sm:$0xff]
          %v855 = vld [vmem:[%s440 + $0x30] sm:$0xff]
          %v856 = vld [vmem:[%s440 + $0x38] sm:$0xff]
          %v857 = vld [vmem:[%s440 + $0x40] sm:$0xff]
          %v858 = vld [vmem:[%s440 + $0x48] sm:$0xff]
          %v859 = vld [vmem:[%s440 + $0x50] sm:$0xff]
          %v860 = vld [vmem:[%s440 + $0x58] sm:$0xff]
          %v861 = vld [vmem:[%s440 + $0x60] sm:$0xff]
          %v862 = vld [vmem:[%s440 + $0x68] sm:$0xff]
          %v863 = vld [vmem:[%s440 + $0x70] sm:$0xff]
          %v864 = vld [vmem:[%s440 + $0x78] sm:$0xff]
          %v865 = vld [vmem:[%s5] sm:$0xf]
          %v867 = vperm.slane %v865, 0
          %v868 = vperm.slane %v865, 2
          %v871 = vperm.slane %v867, 0
          %v872 = vperm.slane %v868, 0
          %v873 = vmul.f32 %v817, %v871
          %v874 = vmul.f32 %v818, %v872
          %v875 = vmul.f32 %v819, %v871
          %v876 = vmul.f32 %v820, %v872
          %v877 = vmul.f32 %v821, %v871
          %v878 = vmul.f32 %v822, %v872
          %v879 = vmul.f32 %v823, %v871
          %v880 = vmul.f32 %v824, %v872
          %v881 = vmul.f32 %v825, %v871
          %v882 = vmul.f32 %v826, %v872
          %v883 = vmul.f32 %v827, %v871
          %v884 = vmul.f32 %v828, %v872
          %v885 = vmul.f32 %v829, %v871
          %v886 = vmul.f32 %v830, %v872
          %v887 = vmul.f32 %v831, %v871
          %v888 = vmul.f32 %v832, %v872
          %v889 = vmul.f32 %v833, %v871
          %v890 = vmul.f32 %v834, %v872
          %v891 = vmul.f32 %v835, %v871
          %v892 = vmul.f32 %v836, %v872
          %v893 = vmul.f32 %v837, %v871
          %v894 = vmul.f32 %v838, %v872
          %v895 = vmul.f32 %v839, %v871
          %v896 = vmul.f32 %v840, %v872
          %v897 = vmul.f32 %v841, %v871
          %v898 = vmul.f32 %v842, %v872
          %v899 = vmul.f32 %v843, %v871
          %v900 = vmul.f32 %v844, %v872
          %v901 = vmul.f32 %v845, %v871
          %v902 = vmul.f32 %v846, %v872
          %v903 = vmul.f32 %v847, %v871
          %v904 = vmul.f32 %v848, %v872
          %v905 = vadd.f32 %v873, %v874
          %906 = vadd.xlane.f32.xlu0 %v905
          %v907 = vpop.xlane.xlu0 %906
          %v908 = vadd.f32 %v875, %v876
          %909 = vadd.xlane.f32.xlu0 %v908
          %v910 = vpop.xlane.xlu0 %909
          %v911 = vadd.f32 %v877, %v878
          %912 = vadd.xlane.f32.xlu0 %v911
          %v913 = vpop.xlane.xlu0 %912
          %v914 = vadd.f32 %v879, %v880
          %915 = vadd.xlane.f32.xlu0 %v914
          %v916 = vpop.xlane.xlu0 %915
          %v917 = vadd.f32 %v881, %v882
          %918 = vadd.xlane.f32.xlu0 %v917
          %v919 = vpop.xlane.xlu0 %918
          %v920 = vadd.f32 %v883, %v884
          %921 = vadd.xlane.f32.xlu0 %v920
          %v922 = vpop.xlane.xlu0 %921
          %v923 = vadd.f32 %v885, %v886
          %924 = vadd.xlane.f32.xlu0 %v923
          %v925 = vpop.xlane.xlu0 %924
          %v926 = vadd.f32 %v887, %v888
          %927 = vadd.xlane.f32.xlu0 %v926
          %v928 = vpop.xlane.xlu0 %927
          %v929 = vadd.f32 %v889, %v890
          %930 = vadd.xlane.f32.xlu0 %v929
          %v931 = vpop.xlane.xlu0 %930
          %v932 = vadd.f32 %v891, %v892
          %933 = vadd.xlane.f32.xlu0 %v932
          %v934 = vpop.xlane.xlu0 %933
          %v935 = vadd.f32 %v893, %v894
          %936 = vadd.xlane.f32.xlu0 %v935
          %v937 = vpop.xlane.xlu0 %936
          %v938 = vadd.f32 %v895, %v896
          %939 = vadd.xlane.f32.xlu0 %v938
          %v940 = vpop.xlane.xlu0 %939
          %v941 = vadd.f32 %v897, %v898
          %942 = vadd.xlane.f32.xlu0 %v941
          %v943 = vpop.xlane.xlu0 %942
          %v944 = vadd.f32 %v899, %v900
          %945 = vadd.xlane.f32.xlu0 %v944
          %v946 = vpop.xlane.xlu0 %945
          %v947 = vadd.f32 %v901, %v902
          %948 = vadd.xlane.f32.xlu0 %v947
          %v949 = vpop.xlane.xlu0 %948
          %v950 = vadd.f32 %v903, %v904
          %951 = vadd.xlane.f32.xlu0 %v950
          %v952 = vpop.xlane.xlu0 %951
          %v953 = vadd.f32 %v907, %v849
          %v954 = vadd.f32 %v910, %v850
          %v955 = vadd.f32 %v913, %v851
          %v956 = vadd.f32 %v916, %v852
          %v957 = vadd.f32 %v919, %v853
          %v958 = vadd.f32 %v922, %v854
          %v959 = vadd.f32 %v925, %v855
          %v960 = vadd.f32 %v928, %v856
          %v961 = vadd.f32 %v931, %v857
          %v962 = vadd.f32 %v934, %v858
          %v963 = vadd.f32 %v937, %v859
          %v964 = vadd.f32 %v940, %v860
          %v965 = vadd.f32 %v943, %v861
          %v966 = vadd.f32 %v946, %v862
          %v967 = vadd.f32 %v949, %v863
          %v968 = vadd.f32 %v952, %v864
          %v969 = vperm.slane %v865, 1
          %v970 = vperm.slane %v865, 3
          %v973 = vperm.slane %v969, 1
          %v974 = vperm.slane %v970, 1
          %v975 = vmul.f32 %v817, %v973
          %v976 = vmul.f32 %v818, %v974
          %v977 = vmul.f32 %v819, %v973
          %v978 = vmul.f32 %v820, %v974
          %v979 = vmul.f32 %v821, %v973
          %v980 = vmul.f32 %v822, %v974
          %v981 = vmul.f32 %v823, %v973
          %v982 = vmul.f32 %v824, %v974
          %v983 = vmul.f32 %v825, %v973
          %v984 = vmul.f32 %v826, %v974
          %v985 = vmul.f32 %v827, %v973
          %v986 = vmul.f32 %v828, %v974
          %v987 = vmul.f32 %v829, %v973
          %v988 = vmul.f32 %v830, %v974
          %v989 = vmul.f32 %v831, %v973
          %v990 = vmul.f32 %v832, %v974
          %v991 = vmul.f32 %v833, %v973
          %v992 = vmul.f32 %v834, %v974
          %v993 = vmul.f32 %v835, %v973
          %v994 = vmul.f32 %v836, %v974
          %v995 = vmul.f32 %v837, %v973
          %v996 = vmul.f32 %v838, %v974
          %v997 = vmul.f32 %v839, %v973
          %v998 = vmul.f32 %v840, %v974
          %v999 = vmul.f32 %v841, %v973
          %v1000 = vmul.f32 %v842, %v974
          %v1001 = vmul.f32 %v843, %v973
          %v1002 = vmul.f32 %v844, %v974
          %v1003 = vmul.f32 %v845, %v973
          %v1004 = vmul.f32 %v846, %v974
          %v1005 = vmul.f32 %v847, %v973
          %v1006 = vmul.f32 %v848, %v974
          %v1007 = vadd.f32 %v975, %v976
          %1008 = vadd.xlane.f32.xlu0 %v1007
          %v1009 = vpop.xlane.xlu0 %1008
          %v1010 = vadd.f32 %v977, %v978
          %1011 = vadd.xlane.f32.xlu0 %v1010
          %v1012 = vpop.xlane.xlu0 %1011
          %v1013 = vadd.f32 %v979, %v980
          %1014 = vadd.xlane.f32.xlu0 %v1013
          %v1015 = vpop.xlane.xlu0 %1014
          %v1016 = vadd.f32 %v981, %v982
          %1017 = vadd.xlane.f32.xlu0 %v1016
          %v1018 = vpop.xlane.xlu0 %1017
          %v1019 = vadd.f32 %v983, %v984
          %1020 = vadd.xlane.f32.xlu0 %v1019
          %v1021 = vpop.xlane.xlu0 %1020
          %v1022 = vadd.f32 %v985, %v986
          %1023 = vadd.xlane.f32.xlu0 %v1022
          %v1024 = vpop.xlane.xlu0 %1023
          %v1025 = vadd.f32 %v987, %v988
          %1026 = vadd.xlane.f32.xlu0 %v1025
          %v1027 = vpop.xlane.xlu0 %1026
          %v1028 = vadd.f32 %v989, %v990
          %1029 = vadd.xlane.f32.xlu0 %v1028
          %v1030 = vpop.xlane.xlu0 %1029
          %v1031 = vadd.f32 %v991, %v992
          %1032 = vadd.xlane.f32.xlu0 %v1031
          %v1033 = vpop.xlane.xlu0 %1032
          %v1034 = vadd.f32 %v993, %v994
          %1035 = vadd.xlane.f32.xlu0 %v1034
          %v1036 = vpop.xlane.xlu0 %1035
          %v1037 = vadd.f32 %v995, %v996
          %1038 = vadd.xlane.f32.xlu0 %v1037
          %v1039 = vpop.xlane.xlu0 %1038
          %v1040 = vadd.f32 %v997, %v998
          %1041 = vadd.xlane.f32.xlu0 %v1040
          %v1042 = vpop.xlane.xlu0 %1041
          %v1043 = vadd.f32 %v999, %v1000
          %1044 = vadd.xlane.f32.xlu0 %v1043
          %v1045 = vpop.xlane.xlu0 %1044
          %v1046 = vadd.f32 %v1001, %v1002
          %1047 = vadd.xlane.f32.xlu0 %v1046
          %v1048 = vpop.xlane.xlu0 %1047
          %v1049 = vadd.f32 %v1003, %v1004
          %1050 = vadd.xlane.f32.xlu0 %v1049
          %v1051 = vpop.xlane.xlu0 %1050
          %v1052 = vadd.f32 %v1005, %v1006
          %1053 = vadd.xlane.f32.xlu0 %v1052
          %v1054 = vpop.xlane.xlu0 %1053
          %v1055 = vadd.f32 %v1009, %v849
          %v1056 = vadd.f32 %v1012, %v850
          %v1057 = vadd.f32 %v1015, %v851
          %v1058 = vadd.f32 %v1018, %v852
          %v1059 = vadd.f32 %v1021, %v853
          %v1060 = vadd.f32 %v1024, %v854
          %v1061 = vadd.f32 %v1027, %v855
          %v1062 = vadd.f32 %v1030, %v856
          %v1063 = vadd.f32 %v1033, %v857
          %v1064 = vadd.f32 %v1036, %v858
          %v1065 = vadd.f32 %v1039, %v859
          %v1066 = vadd.f32 %v1042, %v860
          %v1067 = vadd.f32 %v1045, %v861
          %v1068 = vadd.f32 %v1048, %v862
          %v1069 = vadd.f32 %v1051, %v863
          %v1070 = vadd.f32 %v1054, %v864
          %v1071 = vtanh.pop %v953
          %v1072 = vtanh.pop %v954
          %v1073 = vtanh.pop %v955
          %v1074 = vtanh.pop %v956
          %v1075 = vtanh.pop %v957
          %v1076 = vtanh.pop %v958
          %v1077 = vtanh.pop %v959
          %v1078 = vtanh.pop %v960
          %v1079 = vtanh.pop %v961
          %v1080 = vtanh.pop %v962
          %v1081 = vtanh.pop %v963
          %v1082 = vtanh.pop %v964
          %v1083 = vtanh.pop %v965
          %v1084 = vtanh.pop %v966
          %v1085 = vtanh.pop %v967
          %v1086 = vtanh.pop %v968
          %v1087 = vtanh.pop %v1055
          %v1088 = vtanh.pop %v1056
          %v1089 = vtanh.pop %v1057
          %v1090 = vtanh.pop %v1058
          %v1091 = vtanh.pop %v1059
          %v1092 = vtanh.pop %v1060
          %v1093 = vtanh.pop %v1061
          %v1094 = vtanh.pop %v1062
          %v1095 = vtanh.pop %v1063
          %v1096 = vtanh.pop %v1064
          %v1097 = vtanh.pop %v1065
          %v1098 = vtanh.pop %v1066
          %v1099 = vtanh.pop %v1067
          %v1100 = vtanh.pop %v1068
          %v1101 = vtanh.pop %v1069
          %v1102 = vtanh.pop %v1070
          %1119 = vrot.lane.b32.xlu0 %v1071, 127
          %v1120 = vpop.permute.xlu0 %1119
          %1121 = vrot.lane.b32.xlu0 %v1072, 127
          %v1122 = vpop.permute.xlu0 %1121
          %1123 = vrot.lane.b32.xlu0 %v1073, 127
          %v1124 = vpop.permute.xlu0 %1123
          %1125 = vrot.lane.b32.xlu0 %v1074, 127
          %v1126 = vpop.permute.xlu0 %1125
          %1127 = vrot.lane.b32.xlu0 %v1075, 127
          %v1128 = vpop.permute.xlu0 %1127
          %1129 = vrot.lane.b32.xlu0 %v1076, 127
          %v1130 = vpop.permute.xlu0 %1129
          %1131 = vrot.lane.b32.xlu0 %v1077, 127
          %v1132 = vpop.permute.xlu0 %1131
          %1133 = vrot.lane.b32.xlu0 %v1078, 127
          %v1134 = vpop.permute.xlu0 %1133
          %1135 = vrot.lane.b32.xlu0 %v1079, 127
          %v1136 = vpop.permute.xlu0 %1135
          %1137 = vrot.lane.b32.xlu0 %v1080, 127
          %v1138 = vpop.permute.xlu0 %1137
          %1139 = vrot.lane.b32.xlu0 %v1081, 127
          %v1140 = vpop.permute.xlu0 %1139
          %1141 = vrot.lane.b32.xlu0 %v1082, 127
          %v1142 = vpop.permute.xlu0 %1141
          %1143 = vrot.lane.b32.xlu0 %v1083, 127
          %v1144 = vpop.permute.xlu0 %1143
          %1145 = vrot.lane.b32.xlu0 %v1084, 127
          %v1146 = vpop.permute.xlu0 %1145
          %1147 = vrot.lane.b32.xlu0 %v1085, 127
          %v1148 = vpop.permute.xlu0 %1147
          %1149 = vrot.lane.b32.xlu0 %v1086, 127
          %v1150 = vpop.permute.xlu0 %1149
          %v1167 = vmul.f32 %v849, %v1120
          %v1168 = vmul.f32 %v850, %v1122
          %v1169 = vmul.f32 %v851, %v1124
          %v1170 = vmul.f32 %v852, %v1126
          %v1171 = vmul.f32 %v853, %v1128
          %v1172 = vmul.f32 %v854, %v1130
          %v1173 = vmul.f32 %v855, %v1132
          %v1174 = vmul.f32 %v856, %v1134
          %v1175 = vmul.f32 %v857, %v1136
          %v1176 = vmul.f32 %v858, %v1138
          %v1177 = vmul.f32 %v859, %v1140
          %v1178 = vmul.f32 %v860, %v1142
          %v1179 = vmul.f32 %v861, %v1144
          %v1180 = vmul.f32 %v862, %v1146
          %v1181 = vmul.f32 %v863, %v1148
          %v1182 = vmul.f32 %v864, %v1150
          %1199 = vrot.lane.b32.xlu0 %v1087, 126
          %v1200 = vpop.permute.xlu0 %1199
          %1201 = vrot.lane.b32.xlu0 %v1088, 126
          %v1202 = vpop.permute.xlu0 %1201
          %1203 = vrot.lane.b32.xlu0 %v1089, 126
          %v1204 = vpop.permute.xlu0 %1203
          %1205 = vrot.lane.b32.xlu0 %v1090, 126
          %v1206 = vpop.permute.xlu0 %1205
          %1207 = vrot.lane.b32.xlu0 %v1091, 126
          %v1208 = vpop.permute.xlu0 %1207
          %1209 = vrot.lane.b32.xlu0 %v1092, 126
          %v1210 = vpop.permute.xlu0 %1209
          %1211 = vrot.lane.b32.xlu0 %v1093, 126
          %v1212 = vpop.permute.xlu0 %1211
          %1213 = vrot.lane.b32.xlu0 %v1094, 126
          %v1214 = vpop.permute.xlu0 %1213
          %1215 = vrot.lane.b32.xlu0 %v1095, 126
          %v1216 = vpop.permute.xlu0 %1215
          %1217 = vrot.lane.b32.xlu0 %v1096, 126
          %v1218 = vpop.permute.xlu0 %1217
          %1219 = vrot.lane.b32.xlu0 %v1097, 126
          %v1220 = vpop.permute.xlu0 %1219
          %1221 = vrot.lane.b32.xlu0 %v1098, 126
          %v1222 = vpop.permute.xlu0 %1221
          %1223 = vrot.lane.b32.xlu0 %v1099, 126
          %v1224 = vpop.permute.xlu0 %1223
          %1225 = vrot.lane.b32.xlu0 %v1100, 126
          %v1226 = vpop.permute.xlu0 %1225
          %1227 = vrot.lane.b32.xlu0 %v1101, 126
          %v1228 = vpop.permute.xlu0 %1227
          %1229 = vrot.lane.b32.xlu0 %v1102, 126
          %v1230 = vpop.permute.xlu0 %1229
          %v1247 = vadd.f32 %v1167, %v1200
          %v1248 = vadd.f32 %v1168, %v1202
          %v1249 = vadd.f32 %v1169, %v1204
          %v1250 = vadd.f32 %v1170, %v1206
          %v1251 = vadd.f32 %v1171, %v1208
          %v1252 = vadd.f32 %v1172, %v1210
          %v1253 = vadd.f32 %v1173, %v1212
          %v1254 = vadd.f32 %v1174, %v1214
          %v1255 = vadd.f32 %v1175, %v1216
          %v1256 = vadd.f32 %v1176, %v1218
          %v1257 = vadd.f32 %v1177, %v1220
          %v1258 = vadd.f32 %v1178, %v1222
          %v1259 = vadd.f32 %v1179, %v1224
          %v1260 = vadd.f32 %v1180, %v1226
          %v1261 = vadd.f32 %v1181, %v1228
          %v1262 = vadd.f32 %v1182, %v1230
          %v1263 = vxor.u32 %v1247, 2147483648
          %v1264 = vxor.u32 %v1248, 2147483648
          %v1265 = vxor.u32 %v1249, 2147483648
          %v1266 = vxor.u32 %v1250, 2147483648
          %v1267 = vxor.u32 %v1251, 2147483648
          %v1268 = vxor.u32 %v1252, 2147483648
          %v1269 = vxor.u32 %v1253, 2147483648
          %v1270 = vxor.u32 %v1254, 2147483648
          %v1271 = vxor.u32 %v1255, 2147483648
          %v1272 = vxor.u32 %v1256, 2147483648
          %v1273 = vxor.u32 %v1257, 2147483648
          %v1274 = vxor.u32 %v1258, 2147483648
          %v1275 = vxor.u32 %v1259, 2147483648
          %v1276 = vxor.u32 %v1260, 2147483648
          %v1277 = vxor.u32 %v1261, 2147483648
          %v1278 = vxor.u32 %v1262, 2147483648
          %v1279 = vmul.f32 %v1263, 1.442695
          %v1280 = vpow.pop %v1279
          %v1281 = vmul.f32 %v1264, 1.442695
          %v1282 = vpow.pop %v1281
          %v1283 = vmul.f32 %v1265, 1.442695
          %v1284 = vpow.pop %v1283
          %v1285 = vmul.f32 %v1266, 1.442695
          %v1286 = vpow.pop %v1285
          %v1287 = vmul.f32 %v1267, 1.442695
          %v1288 = vpow.pop %v1287
          %v1289 = vmul.f32 %v1268, 1.442695
          %v1290 = vpow.pop %v1289
          %v1291 = vmul.f32 %v1269, 1.442695
          %v1292 = vpow.pop %v1291
          %v1293 = vmul.f32 %v1270, 1.442695
          %v1294 = vpow.pop %v1293
          %v1295 = vmul.f32 %v1271, 1.442695
          %v1296 = vpow.pop %v1295
          %v1297 = vmul.f32 %v1272, 1.442695
          %v1298 = vpow.pop %v1297
          %v1299 = vmul.f32 %v1273, 1.442695
          %v1300 = vpow.pop %v1299
          %v1301 = vmul.f32 %v1274, 1.442695
          %v1302 = vpow.pop %v1301
          %v1303 = vmul.f32 %v1275, 1.442695
          %v1304 = vpow.pop %v1303
          %v1305 = vmul.f32 %v1276, 1.442695
          %v1306 = vpow.pop %v1305
          %v1307 = vmul.f32 %v1277, 1.442695
          %v1308 = vpow.pop %v1307
          %v1309 = vmul.f32 %v1278, 1.442695
          %v1310 = vpow.pop %v1309
          %v1311 = vadd.f32 %v1280, 1.0
          %v1312 = vadd.f32 %v1282, 1.0
          %v1313 = vadd.f32 %v1284, 1.0
          %v1314 = vadd.f32 %v1286, 1.0
          %v1315 = vadd.f32 %v1288, 1.0
          %v1316 = vadd.f32 %v1290, 1.0
          %v1317 = vadd.f32 %v1292, 1.0
          %v1318 = vadd.f32 %v1294, 1.0
          %v1319 = vadd.f32 %v1296, 1.0
          %v1320 = vadd.f32 %v1298, 1.0
          %v1321 = vadd.f32 %v1300, 1.0
          %v1322 = vadd.f32 %v1302, 1.0
          %v1323 = vadd.f32 %v1304, 1.0
          %v1324 = vadd.f32 %v1306, 1.0
          %v1325 = vadd.f32 %v1308, 1.0
          %v1326 = vadd.f32 %v1310, 1.0
          %v1327 = vrcp.pop %v1311
          %v1328 = vmul.f32 %v1311, %v1327
          %v1329 = vsub.f32 1.0, %v1328
          %v1330 = vmul.f32 %v1327, %v1329
          %v1331 = vadd.f32 %v1327, %v1330
          %vm1332 = vweird.f32 %v1311
          %vm1333 = vweird.f32 %v1327
          %vm1334 = vmor %vm1332, %vm1333
          %v1335 = vsel %vm1334, %v1327, %v1331
          %v1336 = vand.u32 2147483647, %v1311
          %vm1337 = vcmp.eq.f32.partialorder %v1336, 8.507059e+37
          %v1338 = vand.u32 %v1311, 2147483648
          %v1339 = vor.u32 1.1754944e-38, %v1338
          %v1340 = vsel %vm1337, %v1339, %v1335
          %v1341 = vmul.f32 1.0, %v1340
          %v1342 = vrcp.pop %v1312
          %v1343 = vmul.f32 %v1312, %v1342
          %v1344 = vsub.f32 1.0, %v1343
          %v1345 = vmul.f32 %v1342, %v1344
          %v1346 = vadd.f32 %v1342, %v1345
          %vm1347 = vweird.f32 %v1312
          %vm1348 = vweird.f32 %v1342
          %vm1349 = vmor %vm1347, %vm1348
          %v1350 = vsel %vm1349, %v1342, %v1346
          %v1351 = vand.u32 2147483647, %v1312
          %vm1352 = vcmp.eq.f32.partialorder %v1351, 8.507059e+37
          %v1353 = vand.u32 %v1312, 2147483648
          %v1354 = vor.u32 1.1754944e-38, %v1353
          %v1355 = vsel %vm1352, %v1354, %v1350
          %v1356 = vmul.f32 1.0, %v1355
          %v1357 = vrcp.pop %v1313
          %v1358 = vmul.f32 %v1313, %v1357
          %v1359 = vsub.f32 1.0, %v1358
          %v1360 = vmul.f32 %v1357, %v1359
          %v1361 = vadd.f32 %v1357, %v1360
          %vm1362 = vweird.f32 %v1313
          %vm1363 = vweird.f32 %v1357
          %vm1364 = vmor %vm1362, %vm1363
          %v1365 = vsel %vm1364, %v1357, %v1361
          %v1366 = vand.u32 2147483647, %v1313
          %vm1367 = vcmp.eq.f32.partialorder %v1366, 8.507059e+37
          %v1368 = vand.u32 %v1313, 2147483648
          %v1369 = vor.u32 1.1754944e-38, %v1368
          %v1370 = vsel %vm1367, %v1369, %v1365
          %v1371 = vmul.f32 1.0, %v1370
          %v1372 = vrcp.pop %v1314
          %v1373 = vmul.f32 %v1314, %v1372
          %v1374 = vsub.f32 1.0, %v1373
          %v1375 = vmul.f32 %v1372, %v1374
          %v1376 = vadd.f32 %v1372, %v1375
          %vm1377 = vweird.f32 %v1314
          %vm1378 = vweird.f32 %v1372
          %vm1379 = vmor %vm1377, %vm1378
          %v1380 = vsel %vm1379, %v1372, %v1376
          %v1381 = vand.u32 2147483647, %v1314
          %vm1382 = vcmp.eq.f32.partialorder %v1381, 8.507059e+37
          %v1383 = vand.u32 %v1314, 2147483648
          %v1384 = vor.u32 1.1754944e-38, %v1383
          %v1385 = vsel %vm1382, %v1384, %v1380
          %v1386 = vmul.f32 1.0, %v1385
          %v1387 = vrcp.pop %v1315
          %v1388 = vmul.f32 %v1315, %v1387
          %v1389 = vsub.f32 1.0, %v1388
          %v1390 = vmul.f32 %v1387, %v1389
          %v1391 = vadd.f32 %v1387, %v1390
          %vm1392 = vweird.f32 %v1315
          %vm1393 = vweird.f32 %v1387
          %vm1394 = vmor %vm1392, %vm1393
          %v1395 = vsel %vm1394, %v1387, %v1391
          %v1396 = vand.u32 2147483647, %v1315
          %vm1397 = vcmp.eq.f32.partialorder %v1396, 8.507059e+37
          %v1398 = vand.u32 %v1315, 2147483648
          %v1399 = vor.u32 1.1754944e-38, %v1398
          %v1400 = vsel %vm1397, %v1399, %v1395
          %v1401 = vmul.f32 1.0, %v1400
          %v1402 = vrcp.pop %v1316
          %v1403 = vmul.f32 %v1316, %v1402
          %v1404 = vsub.f32 1.0, %v1403
          %v1405 = vmul.f32 %v1402, %v1404
          %v1406 = vadd.f32 %v1402, %v1405
          %vm1407 = vweird.f32 %v1316
          %vm1408 = vweird.f32 %v1402
          %vm1409 = vmor %vm1407, %vm1408
          %v1410 = vsel %vm1409, %v1402, %v1406
          %v1411 = vand.u32 2147483647, %v1316
          %vm1412 = vcmp.eq.f32.partialorder %v1411, 8.507059e+37
          %v1413 = vand.u32 %v1316, 2147483648
          %v1414 = vor.u32 1.1754944e-38, %v1413
          %v1415 = vsel %vm1412, %v1414, %v1410
          %v1416 = vmul.f32 1.0, %v1415
          %v1417 = vrcp.pop %v1317
          %v1418 = vmul.f32 %v1317, %v1417
          %v1419 = vsub.f32 1.0, %v1418
          %v1420 = vmul.f32 %v1417, %v1419
          %v1421 = vadd.f32 %v1417, %v1420
          %vm1422 = vweird.f32 %v1317
          %vm1423 = vweird.f32 %v1417
          %vm1424 = vmor %vm1422, %vm1423
          %v1425 = vsel %vm1424, %v1417, %v1421
          %v1426 = vand.u32 2147483647, %v1317
          %vm1427 = vcmp.eq.f32.partialorder %v1426, 8.507059e+37
          %v1428 = vand.u32 %v1317, 2147483648
          %v1429 = vor.u32 1.1754944e-38, %v1428
          %v1430 = vsel %vm1427, %v1429, %v1425
          %v1431 = vmul.f32 1.0, %v1430
          %v1432 = vrcp.pop %v1318
          %v1433 = vmul.f32 %v1318, %v1432
          %v1434 = vsub.f32 1.0, %v1433
          %v1435 = vmul.f32 %v1432, %v1434
          %v1436 = vadd.f32 %v1432, %v1435
          %vm1437 = vweird.f32 %v1318
          %vm1438 = vweird.f32 %v1432
          %vm1439 = vmor %vm1437, %vm1438
          %v1440 = vsel %vm1439, %v1432, %v1436
          %v1441 = vand.u32 2147483647, %v1318
          %vm1442 = vcmp.eq.f32.partialorder %v1441, 8.507059e+37
          %v1443 = vand.u32 %v1318, 2147483648
          %v1444 = vor.u32 1.1754944e-38, %v1443
          %v1445 = vsel %vm1442, %v1444, %v1440
          %v1446 = vmul.f32 1.0, %v1445
          %v1447 = vrcp.pop %v1319
          %v1448 = vmul.f32 %v1319, %v1447
          %v1449 = vsub.f32 1.0, %v1448
          %v1450 = vmul.f32 %v1447, %v1449
          %v1451 = vadd.f32 %v1447, %v1450
          %vm1452 = vweird.f32 %v1319
          %vm1453 = vweird.f32 %v1447
          %vm1454 = vmor %vm1452, %vm1453
          %v1455 = vsel %vm1454, %v1447, %v1451
          %v1456 = vand.u32 2147483647, %v1319
          %vm1457 = vcmp.eq.f32.partialorder %v1456, 8.507059e+37
          %v1458 = vand.u32 %v1319, 2147483648
          %v1459 = vor.u32 1.1754944e-38, %v1458
          %v1460 = vsel %vm1457, %v1459, %v1455
          %v1461 = vmul.f32 1.0, %v1460
          %v1462 = vrcp.pop %v1320
          %v1463 = vmul.f32 %v1320, %v1462
          %v1464 = vsub.f32 1.0, %v1463
          %v1465 = vmul.f32 %v1462, %v1464
          %v1466 = vadd.f32 %v1462, %v1465
          %vm1467 = vweird.f32 %v1320
          %vm1468 = vweird.f32 %v1462
          %vm1469 = vmor %vm1467, %vm1468
          %v1470 = vsel %vm1469, %v1462, %v1466
          %v1471 = vand.u32 2147483647, %v1320
          %vm1472 = vcmp.eq.f32.partialorder %v1471, 8.507059e+37
          %v1473 = vand.u32 %v1320, 2147483648
          %v1474 = vor.u32 1.1754944e-38, %v1473
          %v1475 = vsel %vm1472, %v1474, %v1470
          %v1476 = vmul.f32 1.0, %v1475
          %v1477 = vrcp.pop %v1321
          %v1478 = vmul.f32 %v1321, %v1477
          %v1479 = vsub.f32 1.0, %v1478
          %v1480 = vmul.f32 %v1477, %v1479
          %v1481 = vadd.f32 %v1477, %v1480
          %vm1482 = vweird.f32 %v1321
          %vm1483 = vweird.f32 %v1477
          %vm1484 = vmor %vm1482, %vm1483
          %v1485 = vsel %vm1484, %v1477, %v1481
          %v1486 = vand.u32 2147483647, %v1321
          %vm1487 = vcmp.eq.f32.partialorder %v1486, 8.507059e+37
          %v1488 = vand.u32 %v1321, 2147483648
          %v1489 = vor.u32 1.1754944e-38, %v1488
          %v1490 = vsel %vm1487, %v1489, %v1485
          %v1491 = vmul.f32 1.0, %v1490
          %v1492 = vrcp.pop %v1322
          %v1493 = vmul.f32 %v1322, %v1492
          %v1494 = vsub.f32 1.0, %v1493
          %v1495 = vmul.f32 %v1492, %v1494
          %v1496 = vadd.f32 %v1492, %v1495
          %vm1497 = vweird.f32 %v1322
          %vm1498 = vweird.f32 %v1492
          %vm1499 = vmor %vm1497, %vm1498
          %v1500 = vsel %vm1499, %v1492, %v1496
          %v1501 = vand.u32 2147483647, %v1322
          %vm1502 = vcmp.eq.f32.partialorder %v1501, 8.507059e+37
          %v1503 = vand.u32 %v1322, 2147483648
          %v1504 = vor.u32 1.1754944e-38, %v1503
          %v1505 = vsel %vm1502, %v1504, %v1500
          %v1506 = vmul.f32 1.0, %v1505
          %v1507 = vrcp.pop %v1323
          %v1508 = vmul.f32 %v1323, %v1507
          %v1509 = vsub.f32 1.0, %v1508
          %v1510 = vmul.f32 %v1507, %v1509
          %v1511 = vadd.f32 %v1507, %v1510
          %vm1512 = vweird.f32 %v1323
          %vm1513 = vweird.f32 %v1507
          %vm1514 = vmor %vm1512, %vm1513
          %v1515 = vsel %vm1514, %v1507, %v1511
          %v1516 = vand.u32 2147483647, %v1323
          %vm1517 = vcmp.eq.f32.partialorder %v1516, 8.507059e+37
          %v1518 = vand.u32 %v1323, 2147483648
          %v1519 = vor.u32 1.1754944e-38, %v1518
          %v1520 = vsel %vm1517, %v1519, %v1515
          %v1521 = vmul.f32 1.0, %v1520
          %v1522 = vrcp.pop %v1324
          %v1523 = vmul.f32 %v1324, %v1522
          %v1524 = vsub.f32 1.0, %v1523
          %v1525 = vmul.f32 %v1522, %v1524
          %v1526 = vadd.f32 %v1522, %v1525
          %vm1527 = vweird.f32 %v1324
          %vm1528 = vweird.f32 %v1522
          %vm1529 = vmor %vm1527, %vm1528
          %v1530 = vsel %vm1529, %v1522, %v1526
          %v1531 = vand.u32 2147483647, %v1324
          %vm1532 = vcmp.eq.f32.partialorder %v1531, 8.507059e+37
          %v1533 = vand.u32 %v1324, 2147483648
          %v1534 = vor.u32 1.1754944e-38, %v1533
          %v1535 = vsel %vm1532, %v1534, %v1530
          %v1536 = vmul.f32 1.0, %v1535
          %v1537 = vrcp.pop %v1325
          %v1538 = vmul.f32 %v1325, %v1537
          %v1539 = vsub.f32 1.0, %v1538
          %v1540 = vmul.f32 %v1537, %v1539
          %v1541 = vadd.f32 %v1537, %v1540
          %vm1542 = vweird.f32 %v1325
          %vm1543 = vweird.f32 %v1537
          %vm1544 = vmor %vm1542, %vm1543
          %v1545 = vsel %vm1544, %v1537, %v1541
          %v1546 = vand.u32 2147483647, %v1325
          %vm1547 = vcmp.eq.f32.partialorder %v1546, 8.507059e+37
          %v1548 = vand.u32 %v1325, 2147483648
          %v1549 = vor.u32 1.1754944e-38, %v1548
          %v1550 = vsel %vm1547, %v1549, %v1545
          %v1551 = vmul.f32 1.0, %v1550
          %v1552 = vrcp.pop %v1326
          %v1553 = vmul.f32 %v1326, %v1552
          %v1554 = vsub.f32 1.0, %v1553
          %v1555 = vmul.f32 %v1552, %v1554
          %v1556 = vadd.f32 %v1552, %v1555
          %vm1557 = vweird.f32 %v1326
          %vm1558 = vweird.f32 %v1552
          %vm1559 = vmor %vm1557, %vm1558
          %v1560 = vsel %vm1559, %v1552, %v1556
          %v1561 = vand.u32 2147483647, %v1326
          %vm1562 = vcmp.eq.f32.partialorder %v1561, 8.507059e+37
          %v1563 = vand.u32 %v1326, 2147483648
          %v1564 = vor.u32 1.1754944e-38, %v1563
          %v1565 = vsel %vm1562, %v1564, %v1560
          %v1566 = vmul.f32 1.0, %v1565
          %v1567 = vld [vmem:[#allocation12] sm:$0xff]
          %v1568 = vld [vmem:[#allocation12 + $0x8] sm:$0xff]
          %v1569 = vld [vmem:[#allocation12 + $0x10] sm:$0xff]
          %v1570 = vld [vmem:[#allocation12 + $0x18] sm:$0xff]
          %v1571 = vld [vmem:[#allocation12 + $0x20] sm:$0xff]
          %v1572 = vld [vmem:[#allocation12 + $0x28] sm:$0xff]
          %v1573 = vld [vmem:[#allocation12 + $0x30] sm:$0xff]
          %v1574 = vld [vmem:[#allocation12 + $0x38] sm:$0xff]
          %v1575 = vld [vmem:[#allocation12 + $0x40] sm:$0xff]
          %v1576 = vld [vmem:[#allocation12 + $0x48] sm:$0xff]
          %v1577 = vld [vmem:[#allocation12 + $0x50] sm:$0xff]
          %v1578 = vld [vmem:[#allocation12 + $0x58] sm:$0xff]
          %v1579 = vld [vmem:[#allocation12 + $0x60] sm:$0xff]
          %v1580 = vld [vmem:[#allocation12 + $0x68] sm:$0xff]
          %v1581 = vld [vmem:[#allocation12 + $0x70] sm:$0xff]
          %v1582 = vld [vmem:[#allocation12 + $0x78] sm:$0xff]
          %v1583 = vld [vmem:[#allocation12 + $0x80] sm:$0xff]
          %v1584 = vld [vmem:[#allocation12 + $0x88] sm:$0xff]
          %v1585 = vld [vmem:[#allocation12 + $0x90] sm:$0xff]
          %v1586 = vld [vmem:[#allocation12 + $0x98] sm:$0xff]
          %v1587 = vld [vmem:[#allocation12 + $0xa0] sm:$0xff]
          %v1588 = vld [vmem:[#allocation12 + $0xa8] sm:$0xff]
          %v1589 = vld [vmem:[#allocation12 + $0xb0] sm:$0xff]
          %v1590 = vld [vmem:[#allocation12 + $0xb8] sm:$0xff]
          %v1591 = vld [vmem:[#allocation12 + $0xc0] sm:$0xff]
          %v1592 = vld [vmem:[#allocation12 + $0xc8] sm:$0xff]
          %v1593 = vld [vmem:[#allocation12 + $0xd0] sm:$0xff]
          %v1594 = vld [vmem:[#allocation12 + $0xd8] sm:$0xff]
          %v1595 = vld [vmem:[#allocation12 + $0xe0] sm:$0xff]
          %v1596 = vld [vmem:[#allocation12 + $0xe8] sm:$0xff]
          %v1597 = vld [vmem:[#allocation12 + $0xf0] sm:$0xff]
          %v1598 = vld [vmem:[#allocation12 + $0xf8] sm:$0xff]
          %v1599 = vld [vmem:[#allocation12 + $0x100] sm:$0xff]
          %v1600 = vld [vmem:[#allocation12 + $0x108] sm:$0xff]
          %v1601 = vld [vmem:[#allocation12 + $0x110] sm:$0xff]
          %v1602 = vld [vmem:[#allocation12 + $0x118] sm:$0xff]
          %v1603 = vld [vmem:[#allocation12 + $0x120] sm:$0xff]
          %v1604 = vld [vmem:[#allocation12 + $0x128] sm:$0xff]
          %v1605 = vld [vmem:[#allocation12 + $0x130] sm:$0xff]
          %v1606 = vld [vmem:[#allocation12 + $0x138] sm:$0xff]
          %v1607 = vld [vmem:[#allocation12 + $0x140] sm:$0xff]
          %v1608 = vld [vmem:[#allocation12 + $0x148] sm:$0xff]
          %v1609 = vld [vmem:[#allocation12 + $0x150] sm:$0xff]
          %v1610 = vld [vmem:[#allocation12 + $0x158] sm:$0xff]
          %v1611 = vld [vmem:[#allocation12 + $0x160] sm:$0xff]
          %v1612 = vld [vmem:[#allocation12 + $0x168] sm:$0xff]
          %v1613 = vld [vmem:[#allocation12 + $0x170] sm:$0xff]
          %v1614 = vld [vmem:[#allocation12 + $0x178] sm:$0xff]
          %v1615 = vld [vmem:[#allocation12 + $0x180] sm:$0xff]
          %v1616 = vld [vmem:[#allocation12 + $0x188] sm:$0xff]
          %v1617 = vld [vmem:[#allocation12 + $0x190] sm:$0xff]
          %v1618 = vld [vmem:[#allocation12 + $0x198] sm:$0xff]
          %v1619 = vld [vmem:[#allocation12 + $0x1a0] sm:$0xff]
          %v1620 = vld [vmem:[#allocation12 + $0x1a8] sm:$0xff]
          %v1621 = vld [vmem:[#allocation12 + $0x1b0] sm:$0xff]
          %v1622 = vld [vmem:[#allocation12 + $0x1b8] sm:$0xff]
          %v1623 = vld [vmem:[#allocation12 + $0x1c0] sm:$0xff]
          %v1624 = vld [vmem:[#allocation12 + $0x1c8] sm:$0xff]
          %v1625 = vld [vmem:[#allocation12 + $0x1d0] sm:$0xff]
          %v1626 = vld [vmem:[#allocation12 + $0x1d8] sm:$0xff]
          %v1627 = vld [vmem:[#allocation12 + $0x1e0] sm:$0xff]
          %v1628 = vld [vmem:[#allocation12 + $0x1e8] sm:$0xff]
          %v1629 = vld [vmem:[#allocation12 + $0x1f0] sm:$0xff]
          %v1630 = vld [vmem:[#allocation12 + $0x1f8] sm:$0xff]
          %1631 = vmatpush.msra.mxu0 %v1597
          %1632 = vmatpush.msra.mxu0 %v1595
          %1633 = vmatpush.msra.mxu0 %v1593
          %1634 = vmatpush.msra.mxu0 %v1591
          %1635 = vmatpush.msra.mxu0 %v1589
          %1636 = vmatpush.msra.mxu0 %v1587
          %1637 = vmatpush.msra.mxu0 %v1585
          %1638 = vmatpush.msra.mxu0 %v1583
          %1639 = vmatpush.msra.mxu0 %v1581
          %1640 = vmatpush.msra.mxu0 %v1579
          %1641 = vmatpush.msra.mxu0 %v1577
          %1642 = vmatpush.msra.mxu0 %v1575
          %1643 = vmatpush.msra.mxu0 %v1573
          %1644 = vmatpush.msra.mxu0 %v1571
          %1645 = vmatpush.msra.mxu0 %v1569
          %1646 = vmatpush.msra.mxu0 %v1567
          %1647 = vmatmul.f32.gmra.mxu0 %v817
          %v1648 = vpop.f32.mrf.mxu0
          %v1649 = vadd.f32 0.0, %v1648
          %1650 = vmatmul.f32.gmra.mxu0 %v819
          %v1651 = vpop.f32.mrf.mxu0
          %v1652 = vadd.f32 0.0, %v1651
          %1653 = vmatmul.f32.gmra.mxu0 %v821
          %v1654 = vpop.f32.mrf.mxu0
          %v1655 = vadd.f32 0.0, %v1654
          %1656 = vmatmul.f32.gmra.mxu0 %v823
          %v1657 = vpop.f32.mrf.mxu0
          %v1658 = vadd.f32 0.0, %v1657
          %1659 = vmatmul.f32.gmra.mxu0 %v825
          %v1660 = vpop.f32.mrf.mxu0
          %v1661 = vadd.f32 0.0, %v1660
          %1662 = vmatmul.f32.gmra.mxu0 %v827
          %v1663 = vpop.f32.mrf.mxu0
          %v1664 = vadd.f32 0.0, %v1663
          %1665 = vmatmul.f32.gmra.mxu0 %v829
          %v1666 = vpop.f32.mrf.mxu0
          %v1667 = vadd.f32 0.0, %v1666
          %1668 = vmatmul.f32.gmra.mxu0 %v831
          %v1669 = vpop.f32.mrf.mxu0
          %v1670 = vadd.f32 0.0, %v1669
          %1671 = vmatmul.f32.gmra.mxu0 %v833
          %v1672 = vpop.f32.mrf.mxu0
          %v1673 = vadd.f32 0.0, %v1672
          %1674 = vmatmul.f32.gmra.mxu0 %v835
          %v1675 = vpop.f32.mrf.mxu0
          %v1676 = vadd.f32 0.0, %v1675
          %1677 = vmatmul.f32.gmra.mxu0 %v837
          %v1678 = vpop.f32.mrf.mxu0
          %v1679 = vadd.f32 0.0, %v1678
          %1680 = vmatmul.f32.gmra.mxu0 %v839
          %v1681 = vpop.f32.mrf.mxu0
          %v1682 = vadd.f32 0.0, %v1681
          %1683 = vmatmul.f32.gmra.mxu0 %v841
          %v1684 = vpop.f32.mrf.mxu0
          %v1685 = vadd.f32 0.0, %v1684
          %1686 = vmatmul.f32.gmra.mxu0 %v843
          %v1687 = vpop.f32.mrf.mxu0
          %v1688 = vadd.f32 0.0, %v1687
          %1689 = vmatmul.f32.gmra.mxu0 %v845
          %v1690 = vpop.f32.mrf.mxu0
          %v1691 = vadd.f32 0.0, %v1690
          %1692 = vmatmul.f32.gmra.mxu0 %v847
          %v1693 = vpop.f32.mrf.mxu0
          %v1694 = vadd.f32 0.0, %v1693
          %1695 = vdwg.mxu0
          %1696 = vmatpush.msra.mxu0 %v1629
          %1697 = vmatpush.msra.mxu0 %v1627
          %1698 = vmatpush.msra.mxu0 %v1625
          %1699 = vmatpush.msra.mxu0 %v1623
          %1700 = vmatpush.msra.mxu0 %v1621
          %1701 = vmatpush.msra.mxu0 %v1619
          %1702 = vmatpush.msra.mxu0 %v1617
          %1703 = vmatpush.msra.mxu0 %v1615
          %1704 = vmatpush.msra.mxu0 %v1613
          %1705 = vmatpush.msra.mxu0 %v1611
          %1706 = vmatpush.msra.mxu0 %v1609
          %1707 = vmatpush.msra.mxu0 %v1607
          %1708 = vmatpush.msra.mxu0 %v1605
          %1709 = vmatpush.msra.mxu0 %v1603
          %1710 = vmatpush.msra.mxu0 %v1601
          %1711 = vmatpush.msra.mxu0 %v1599
          %1712 = vmatmul.f32.gmra.mxu0 %v818
          %v1713 = vpop.f32.mrf.mxu0
          %v1714 = vadd.f32 %v1649, %v1713
          %1715 = vmatmul.f32.gmra.mxu0 %v820
          %v1716 = vpop.f32.mrf.mxu0
          %v1717 = vadd.f32 %v1652, %v1716
          %1718 = vmatmul.f32.gmra.mxu0 %v822
          %v1719 = vpop.f32.mrf.mxu0
          %v1720 = vadd.f32 %v1655, %v1719
          %1721 = vmatmul.f32.gmra.mxu0 %v824
          %v1722 = vpop.f32.mrf.mxu0
          %v1723 = vadd.f32 %v1658, %v1722
          %1724 = vmatmul.f32.gmra.mxu0 %v826
          %v1725 = vpop.f32.mrf.mxu0
          %v1726 = vadd.f32 %v1661, %v1725
          %1727 = vmatmul.f32.gmra.mxu0 %v828
          %v1728 = vpop.f32.mrf.mxu0
          %v1729 = vadd.f32 %v1664, %v1728
          %1730 = vmatmul.f32.gmra.mxu0 %v830
          %v1731 = vpop.f32.mrf.mxu0
          %v1732 = vadd.f32 %v1667, %v1731
          %1733 = vmatmul.f32.gmra.mxu0 %v832
          %v1734 = vpop.f32.mrf.mxu0
          %v1735 = vadd.f32 %v1670, %v1734
          %1736 = vmatmul.f32.gmra.mxu0 %v834
          %v1737 = vpop.f32.mrf.mxu0
          %v1738 = vadd.f32 %v1673, %v1737
          %1739 = vmatmul.f32.gmra.mxu0 %v836
          %v1740 = vpop.f32.mrf.mxu0
          %v1741 = vadd.f32 %v1676, %v1740
          %1742 = vmatmul.f32.gmra.mxu0 %v838
          %v1743 = vpop.f32.mrf.mxu0
          %v1744 = vadd.f32 %v1679, %v1743
          %1745 = vmatmul.f32.gmra.mxu0 %v840
          %v1746 = vpop.f32.mrf.mxu0
          %v1747 = vadd.f32 %v1682, %v1746
          %1748 = vmatmul.f32.gmra.mxu0 %v842
          %v1749 = vpop.f32.mrf.mxu0
          %v1750 = vadd.f32 %v1685, %v1749
          %1751 = vmatmul.f32.gmra.mxu0 %v844
          %v1752 = vpop.f32.mrf.mxu0
          %v1753 = vadd.f32 %v1688, %v1752
          %1754 = vmatmul.f32.gmra.mxu0 %v846
          %v1755 = vpop.f32.mrf.mxu0
          %v1756 = vadd.f32 %v1691, %v1755
          %1757 = vmatmul.f32.gmra.mxu0 %v848
          %v1758 = vpop.f32.mrf.mxu0
          %v1759 = vadd.f32 %v1694, %v1758
          %1760 = vdwg.mxu0
          %1761 = vmatpush.msra.mxu0 %v1598
          %1762 = vmatpush.msra.mxu0 %v1596
          %1763 = vmatpush.msra.mxu0 %v1594
          %1764 = vmatpush.msra.mxu0 %v1592
          %1765 = vmatpush.msra.mxu0 %v1590
          %1766 = vmatpush.msra.mxu0 %v1588
          %1767 = vmatpush.msra.mxu0 %v1586
          %1768 = vmatpush.msra.mxu0 %v1584
          %1769 = vmatpush.msra.mxu0 %v1582
          %1770 = vmatpush.msra.mxu0 %v1580
          %1771 = vmatpush.msra.mxu0 %v1578
          %1772 = vmatpush.msra.mxu0 %v1576
          %1773 = vmatpush.msra.mxu0 %v1574
          %1774 = vmatpush.msra.mxu0 %v1572
          %1775 = vmatpush.msra.mxu0 %v1570
          %1776 = vmatpush.msra.mxu0 %v1568
          %1777 = vmatmul.f32.gmra.mxu0 %v817
          %v1778 = vpop.f32.mrf.mxu0
          %v1779 = vadd.f32 0.0, %v1778
          %1780 = vmatmul.f32.gmra.mxu0 %v819
          %v1781 = vpop.f32.mrf.mxu0
          %v1782 = vadd.f32 0.0, %v1781
          %1783 = vmatmul.f32.gmra.mxu0 %v821
          %v1784 = vpop.f32.mrf.mxu0
          %v1785 = vadd.f32 0.0, %v1784
          %1786 = vmatmul.f32.gmra.mxu0 %v823
          %v1787 = vpop.f32.mrf.mxu0
          %v1788 = vadd.f32 0.0, %v1787
          %1789 = vmatmul.f32.gmra.mxu0 %v825
          %v1790 = vpop.f32.mrf.mxu0
          %v1791 = vadd.f32 0.0, %v1790
          %1792 = vmatmul.f32.gmra.mxu0 %v827
          %v1793 = vpop.f32.mrf.mxu0
          %v1794 = vadd.f32 0.0, %v1793
          %1795 = vmatmul.f32.gmra.mxu0 %v829
          %v1796 = vpop.f32.mrf.mxu0
          %v1797 = vadd.f32 0.0, %v1796
          %1798 = vmatmul.f32.gmra.mxu0 %v831
          %v1799 = vpop.f32.mrf.mxu0
          %v1800 = vadd.f32 0.0, %v1799
          %1801 = vmatmul.f32.gmra.mxu0 %v833
          %v1802 = vpop.f32.mrf.mxu0
          %v1803 = vadd.f32 0.0, %v1802
          %1804 = vmatmul.f32.gmra.mxu0 %v835
          %v1805 = vpop.f32.mrf.mxu0
          %v1806 = vadd.f32 0.0, %v1805
          %1807 = vmatmul.f32.gmra.mxu0 %v837
          %v1808 = vpop.f32.mrf.mxu0
          %v1809 = vadd.f32 0.0, %v1808
          %1810 = vmatmul.f32.gmra.mxu0 %v839
          %v1811 = vpop.f32.mrf.mxu0
          %v1812 = vadd.f32 0.0, %v1811
          %1813 = vmatmul.f32.gmra.mxu0 %v841
          %v1814 = vpop.f32.mrf.mxu0
          %v1815 = vadd.f32 0.0, %v1814
          %1816 = vmatmul.f32.gmra.mxu0 %v843
          %v1817 = vpop.f32.mrf.mxu0
          %v1818 = vadd.f32 0.0, %v1817
          %1819 = vmatmul.f32.gmra.mxu0 %v845
          %v1820 = vpop.f32.mrf.mxu0
          %v1821 = vadd.f32 0.0, %v1820
          %1822 = vmatmul.f32.gmra.mxu0 %v847
          %v1823 = vpop.f32.mrf.mxu0
          %v1824 = vadd.f32 0.0, %v1823
          %1825 = vdwg.mxu0
          %1826 = vmatpush.msra.mxu0 %v1630
          %1827 = vmatpush.msra.mxu0 %v1628
          %1828 = vmatpush.msra.mxu0 %v1626
          %1829 = vmatpush.msra.mxu0 %v1624
          %1830 = vmatpush.msra.mxu0 %v1622
          %1831 = vmatpush.msra.mxu0 %v1620
          %1832 = vmatpush.msra.mxu0 %v1618
          %1833 = vmatpush.msra.mxu0 %v1616
          %1834 = vmatpush.msra.mxu0 %v1614
          %1835 = vmatpush.msra.mxu0 %v1612
          %1836 = vmatpush.msra.mxu0 %v1610
          %1837 = vmatpush.msra.mxu0 %v1608
          %1838 = vmatpush.msra.mxu0 %v1606
          %1839 = vmatpush.msra.mxu0 %v1604
          %1840 = vmatpush.msra.mxu0 %v1602
          %1841 = vmatpush.msra.mxu0 %v1600
          %1842 = vmatmul.f32.gmra.mxu0 %v818
          %v1843 = vpop.f32.mrf.mxu0
          %v1844 = vadd.f32 %v1779, %v1843
          %1845 = vmatmul.f32.gmra.mxu0 %v820
          %v1846 = vpop.f32.mrf.mxu0
          %v1847 = vadd.f32 %v1782, %v1846
          %1848 = vmatmul.f32.gmra.mxu0 %v822
          %v1849 = vpop.f32.mrf.mxu0
          %v1850 = vadd.f32 %v1785, %v1849
          %1851 = vmatmul.f32.gmra.mxu0 %v824
          %v1852 = vpop.f32.mrf.mxu0
          %v1853 = vadd.f32 %v1788, %v1852
          %1854 = vmatmul.f32.gmra.mxu0 %v826
          %v1855 = vpop.f32.mrf.mxu0
          %v1856 = vadd.f32 %v1791, %v1855
          %1857 = vmatmul.f32.gmra.mxu0 %v828
          %v1858 = vpop.f32.mrf.mxu0
          %v1859 = vadd.f32 %v1794, %v1858
          %1860 = vmatmul.f32.gmra.mxu0 %v830
          %v1861 = vpop.f32.mrf.mxu0
          %v1862 = vadd.f32 %v1797, %v1861
          %1863 = vmatmul.f32.gmra.mxu0 %v832
          %v1864 = vpop.f32.mrf.mxu0
          %v1865 = vadd.f32 %v1800, %v1864
          %1866 = vmatmul.f32.gmra.mxu0 %v834
          %v1867 = vpop.f32.mrf.mxu0
          %v1868 = vadd.f32 %v1803, %v1867
          %1869 = vmatmul.f32.gmra.mxu0 %v836
          %v1870 = vpop.f32.mrf.mxu0
          %v1871 = vadd.f32 %v1806, %v1870
          %1872 = vmatmul.f32.gmra.mxu0 %v838
          %v1873 = vpop.f32.mrf.mxu0
          %v1874 = vadd.f32 %v1809, %v1873
          %1875 = vmatmul.f32.gmra.mxu0 %v840
          %v1876 = vpop.f32.mrf.mxu0
          %v1877 = vadd.f32 %v1812, %v1876
          %1878 = vmatmul.f32.gmra.mxu0 %v842
          %v1879 = vpop.f32.mrf.mxu0
          %v1880 = vadd.f32 %v1815, %v1879
          %1881 = vmatmul.f32.gmra.mxu0 %v844
          %v1882 = vpop.f32.mrf.mxu0
          %v1883 = vadd.f32 %v1818, %v1882
          %1884 = vmatmul.f32.gmra.mxu0 %v846
          %v1885 = vpop.f32.mrf.mxu0
          %v1886 = vadd.f32 %v1821, %v1885
          %1887 = vmatmul.f32.gmra.mxu0 %v848
          %v1888 = vpop.f32.mrf.mxu0
          %v1889 = vadd.f32 %v1824, %v1888
          %1890 = vdwg.mxu0
          %v1891 = vmul.f32 %v1341, 0.5
          %v1892 = vmul.f32 %v1356, 0.5
          %v1893 = vmul.f32 %v1371, 0.5
          %v1894 = vmul.f32 %v1386, 0.5
          %v1895 = vmul.f32 %v1401, 0.5
          %v1896 = vmul.f32 %v1416, 0.5
          %v1897 = vmul.f32 %v1431, 0.5
          %v1898 = vmul.f32 %v1446, 0.5
          %v1899 = vmul.f32 %v1461, 0.5
          %v1900 = vmul.f32 %v1476, 0.5
          %v1901 = vmul.f32 %v1491, 0.5
          %v1902 = vmul.f32 %v1506, 0.5
          %v1903 = vmul.f32 %v1521, 0.5
          %v1904 = vmul.f32 %v1536, 0.5
          %v1905 = vmul.f32 %v1551, 0.5
          %v1906 = vmul.f32 %v1566, 0.5
          %v1907 = vld [vmem:[#allocation2] sm:$0xff]
          %v1908 = vld [vmem:[#allocation2 + $0x8] sm:$0xff]
          %v1909 = vld [vmem:[#allocation2 + $0x10] sm:$0xff]
          %v1910 = vld [vmem:[#allocation2 + $0x18] sm:$0xff]
          %v1911 = vld [vmem:[#allocation2 + $0x20] sm:$0xff]
          %v1912 = vld [vmem:[#allocation2 + $0x28] sm:$0xff]
          %v1913 = vld [vmem:[#allocation2 + $0x30] sm:$0xff]
          %v1914 = vld [vmem:[#allocation2 + $0x38] sm:$0xff]
          %v1915 = vld [vmem:[#allocation2 + $0x40] sm:$0xff]
          %v1916 = vld [vmem:[#allocation2 + $0x48] sm:$0xff]
          %v1917 = vld [vmem:[#allocation2 + $0x50] sm:$0xff]
          %v1918 = vld [vmem:[#allocation2 + $0x58] sm:$0xff]
          %v1919 = vld [vmem:[#allocation2 + $0x60] sm:$0xff]
          %v1920 = vld [vmem:[#allocation2 + $0x68] sm:$0xff]
          %v1921 = vld [vmem:[#allocation2 + $0x70] sm:$0xff]
          %v1922 = vld [vmem:[#allocation2 + $0x78] sm:$0xff]
          %v1923 = vld [vmem:[#allocation2 + $0x80] sm:$0xff]
          %v1924 = vld [vmem:[#allocation2 + $0x88] sm:$0xff]
          %v1925 = vld [vmem:[#allocation2 + $0x90] sm:$0xff]
          %v1926 = vld [vmem:[#allocation2 + $0x98] sm:$0xff]
          %v1927 = vld [vmem:[#allocation2 + $0xa0] sm:$0xff]
          %v1928 = vld [vmem:[#allocation2 + $0xa8] sm:$0xff]
          %v1929 = vld [vmem:[#allocation2 + $0xb0] sm:$0xff]
          %v1930 = vld [vmem:[#allocation2 + $0xb8] sm:$0xff]
          %v1931 = vld [vmem:[#allocation2 + $0xc0] sm:$0xff]
          %v1932 = vld [vmem:[#allocation2 + $0xc8] sm:$0xff]
          %v1933 = vld [vmem:[#allocation2 + $0xd0] sm:$0xff]
          %v1934 = vld [vmem:[#allocation2 + $0xd8] sm:$0xff]
          %v1935 = vld [vmem:[#allocation2 + $0xe0] sm:$0xff]
          %v1936 = vld [vmem:[#allocation2 + $0xe8] sm:$0xff]
          %v1937 = vld [vmem:[#allocation2 + $0xf0] sm:$0xff]
          %v1938 = vld [vmem:[#allocation2 + $0xf8] sm:$0xff]
          %v1939 = vsub.f32 %v1907, %v817
          %v1940 = vsub.f32 %v1908, %v818
          %v1941 = vsub.f32 %v1909, %v819
          %v1942 = vsub.f32 %v1910, %v820
          %v1943 = vsub.f32 %v1911, %v821
          %v1944 = vsub.f32 %v1912, %v822
          %v1945 = vsub.f32 %v1913, %v823
          %v1946 = vsub.f32 %v1914, %v824
          %v1947 = vsub.f32 %v1915, %v825
          %v1948 = vsub.f32 %v1916, %v826
          %v1949 = vsub.f32 %v1917, %v827
          %v1950 = vsub.f32 %v1918, %v828
          %v1951 = vsub.f32 %v1919, %v829
          %v1952 = vsub.f32 %v1920, %v830
          %v1953 = vsub.f32 %v1921, %v831
          %v1954 = vsub.f32 %v1922, %v832
          %v1955 = vsub.f32 %v1923, %v833
          %v1956 = vsub.f32 %v1924, %v834
          %v1957 = vsub.f32 %v1925, %v835
          %v1958 = vsub.f32 %v1926, %v836
          %v1959 = vsub.f32 %v1927, %v837
          %v1960 = vsub.f32 %v1928, %v838
          %v1961 = vsub.f32 %v1929, %v839
          %v1962 = vsub.f32 %v1930, %v840
          %v1963 = vsub.f32 %v1931, %v841
          %v1964 = vsub.f32 %v1932, %v842
          %v1965 = vsub.f32 %v1933, %v843
          %v1966 = vsub.f32 %v1934, %v844
          %v1967 = vsub.f32 %v1935, %v845
          %v1968 = vsub.f32 %v1936, %v846
          %v1969 = vsub.f32 %v1937, %v847
          %v1970 = vsub.f32 %v1938, %v848
          %1972 = vset.pattern.permute.xlu0 0
          %1973 = vperm.xlu0 %1972, %v1891
          %v1974 = vpop.permute.xlu0 %1973
          %1977 = vset.pattern.permute.xlu0 0
          %1978 = vperm.xlu0 %1977, %v1892
          %v1979 = vpop.permute.xlu0 %1978
          %1982 = vset.pattern.permute.xlu0 0
          %1983 = vperm.xlu0 %1982, %v1893
          %v1984 = vpop.permute.xlu0 %1983
          %1987 = vset.pattern.permute.xlu0 0
          %1988 = vperm.xlu0 %1987, %v1894
          %v1989 = vpop.permute.xlu0 %1988
          %1992 = vset.pattern.permute.xlu0 0
          %1993 = vperm.xlu0 %1992, %v1895
          %v1994 = vpop.permute.xlu0 %1993
          %1997 = vset.pattern.permute.xlu0 0
          %1998 = vperm.xlu0 %1997, %v1896
          %v1999 = vpop.permute.xlu0 %1998
          %2002 = vset.pattern.permute.xlu0 0
          %2003 = vperm.xlu0 %2002, %v1897
          %v2004 = vpop.permute.xlu0 %2003
          %2007 = vset.pattern.permute.xlu0 0
          %2008 = vperm.xlu0 %2007, %v1898
          %v2009 = vpop.permute.xlu0 %2008
          %2012 = vset.pattern.permute.xlu0 0
          %2013 = vperm.xlu0 %2012, %v1899
          %v2014 = vpop.permute.xlu0 %2013
          %2017 = vset.pattern.permute.xlu0 0
          %2018 = vperm.xlu0 %2017, %v1900
          %v2019 = vpop.permute.xlu0 %2018
          %2022 = vset.pattern.permute.xlu0 0
          %2023 = vperm.xlu0 %2022, %v1901
          %v2024 = vpop.permute.xlu0 %2023
          %2027 = vset.pattern.permute.xlu0 0
          %2028 = vperm.xlu0 %2027, %v1902
          %v2029 = vpop.permute.xlu0 %2028
          %2032 = vset.pattern.permute.xlu0 0
          %2033 = vperm.xlu0 %2032, %v1903
          %v2034 = vpop.permute.xlu0 %2033
          %2037 = vset.pattern.permute.xlu0 0
          %2038 = vperm.xlu0 %2037, %v1904
          %v2039 = vpop.permute.xlu0 %2038
          %2042 = vset.pattern.permute.xlu0 0
          %2043 = vperm.xlu0 %2042, %v1905
          %v2044 = vpop.permute.xlu0 %2043
          %2047 = vset.pattern.permute.xlu0 0
          %2048 = vperm.xlu0 %2047, %v1906
          %v2049 = vpop.permute.xlu0 %2048
          %v2051 = vmul.f32 %v1974, %v1939
          %v2052 = vmul.f32 %v1974, %v1940
          %v2053 = vmul.f32 %v1979, %v1941
          %v2054 = vmul.f32 %v1979, %v1942
          %v2055 = vmul.f32 %v1984, %v1943
          %v2056 = vmul.f32 %v1984, %v1944
          %v2057 = vmul.f32 %v1989, %v1945
          %v2058 = vmul.f32 %v1989, %v1946
          %v2059 = vmul.f32 %v1994, %v1947
          %v2060 = vmul.f32 %v1994, %v1948
          %v2061 = vmul.f32 %v1999, %v1949
          %v2062 = vmul.f32 %v1999, %v1950
          %v2063 = vmul.f32 %v2004, %v1951
          %v2064 = vmul.f32 %v2004, %v1952
          %v2065 = vmul.f32 %v2009, %v1953
          %v2066 = vmul.f32 %v2009, %v1954
          %v2067 = vmul.f32 %v2014, %v1955
          %v2068 = vmul.f32 %v2014, %v1956
          %v2069 = vmul.f32 %v2019, %v1957
          %v2070 = vmul.f32 %v2019, %v1958
          %v2071 = vmul.f32 %v2024, %v1959
          %v2072 = vmul.f32 %v2024, %v1960
          %v2073 = vmul.f32 %v2029, %v1961
          %v2074 = vmul.f32 %v2029, %v1962
          %v2075 = vmul.f32 %v2034, %v1963
          %v2076 = vmul.f32 %v2034, %v1964
          %v2077 = vmul.f32 %v2039, %v1965
          %v2078 = vmul.f32 %v2039, %v1966
          %v2079 = vmul.f32 %v2044, %v1967
          %v2080 = vmul.f32 %v2044, %v1968
          %v2081 = vmul.f32 %v2049, %v1969
          %v2082 = vmul.f32 %v2049, %v1970
          %v2083 = vadd.f32 %v2051, %v1714
          %v2084 = vadd.f32 %v2052, %v1844
          %v2085 = vadd.f32 %v2053, %v1717
          %v2086 = vadd.f32 %v2054, %v1847
          %v2087 = vadd.f32 %v2055, %v1720
          %v2088 = vadd.f32 %v2056, %v1850
          %v2089 = vadd.f32 %v2057, %v1723
          %v2090 = vadd.f32 %v2058, %v1853
          %v2091 = vadd.f32 %v2059, %v1726
          %v2092 = vadd.f32 %v2060, %v1856
          %v2093 = vadd.f32 %v2061, %v1729
          %v2094 = vadd.f32 %v2062, %v1859
          %v2095 = vadd.f32 %v2063, %v1732
          %v2096 = vadd.f32 %v2064, %v1862
          %v2097 = vadd.f32 %v2065, %v1735
          %v2098 = vadd.f32 %v2066, %v1865
          %v2099 = vadd.f32 %v2067, %v1738
          %v2100 = vadd.f32 %v2068, %v1868
          %v2101 = vadd.f32 %v2069, %v1741
          %v2102 = vadd.f32 %v2070, %v1871
          %v2103 = vadd.f32 %v2071, %v1744
          %v2104 = vadd.f32 %v2072, %v1874
          %v2105 = vadd.f32 %v2073, %v1747
          %v2106 = vadd.f32 %v2074, %v1877
          %v2107 = vadd.f32 %v2075, %v1750
          %v2108 = vadd.f32 %v2076, %v1880
          %v2109 = vadd.f32 %v2077, %v1753
          %v2110 = vadd.f32 %v2078, %v1883
          %v2111 = vadd.f32 %v2079, %v1756
          %v2112 = vadd.f32 %v2080, %v1886
          %v2113 = vadd.f32 %v2081, %v1759
          %v2114 = vadd.f32 %v2082, %v1889
          %v2115 = vsub.f32 %v2083, %v817
          %v2116 = vsub.f32 %v2084, %v818
          %v2117 = vsub.f32 %v2085, %v819
          %v2118 = vsub.f32 %v2086, %v820
          %v2119 = vsub.f32 %v2087, %v821
          %v2120 = vsub.f32 %v2088, %v822
          %v2121 = vsub.f32 %v2089, %v823
          %v2122 = vsub.f32 %v2090, %v824
          %v2123 = vsub.f32 %v2091, %v825
          %v2124 = vsub.f32 %v2092, %v826
          %v2125 = vsub.f32 %v2093, %v827
          %v2126 = vsub.f32 %v2094, %v828
          %v2127 = vsub.f32 %v2095, %v829
          %v2128 = vsub.f32 %v2096, %v830
          %v2129 = vsub.f32 %v2097, %v831
          %v2130 = vsub.f32 %v2098, %v832
          %v2131 = vsub.f32 %v2099, %v833
          %v2132 = vsub.f32 %v2100, %v834
          %v2133 = vsub.f32 %v2101, %v835
          %v2134 = vsub.f32 %v2102, %v836
          %v2135 = vsub.f32 %v2103, %v837
          %v2136 = vsub.f32 %v2104, %v838
          %v2137 = vsub.f32 %v2105, %v839
          %v2138 = vsub.f32 %v2106, %v840
          %v2139 = vsub.f32 %v2107, %v841
          %v2140 = vsub.f32 %v2108, %v842
          %v2141 = vsub.f32 %v2109, %v843
          %v2142 = vsub.f32 %v2110, %v844
          %v2143 = vsub.f32 %v2111, %v845
          %v2144 = vsub.f32 %v2112, %v846
          %v2145 = vsub.f32 %v2113, %v847
          %v2146 = vsub.f32 %v2114, %v848
          %v2147 = vld [vmem:[%s420] sm:$0xff]
          %v2148 = vld [vmem:[%s420 + $0x8] sm:$0xff]
          %v2149 = vld [vmem:[%s420 + $0x10] sm:$0xff]
          %v2150 = vld [vmem:[%s420 + $0x18] sm:$0xff]
          %v2151 = vld [vmem:[%s420 + $0x20] sm:$0xff]
          %v2152 = vld [vmem:[%s420 + $0x28] sm:$0xff]
          %v2153 = vld [vmem:[%s420 + $0x30] sm:$0xff]
          %v2154 = vld [vmem:[%s420 + $0x38] sm:$0xff]
          %v2155 = vld [vmem:[%s420 + $0x40] sm:$0xff]
          %v2156 = vld [vmem:[%s420 + $0x48] sm:$0xff]
          %v2157 = vld [vmem:[%s420 + $0x50] sm:$0xff]
          %v2158 = vld [vmem:[%s420 + $0x58] sm:$0xff]
          %v2159 = vld [vmem:[%s420 + $0x60] sm:$0xff]
          %v2160 = vld [vmem:[%s420 + $0x68] sm:$0xff]
          %v2161 = vld [vmem:[%s420 + $0x70] sm:$0xff]
          %v2162 = vld [vmem:[%s420 + $0x78] sm:$0xff]
          %v2163 = vld [vmem:[%s420 + $0x80] sm:$0xff]
          %v2164 = vld [vmem:[%s420 + $0x88] sm:$0xff]
          %v2165 = vld [vmem:[%s420 + $0x90] sm:$0xff]
          %v2166 = vld [vmem:[%s420 + $0x98] sm:$0xff]
          %v2167 = vld [vmem:[%s420 + $0xa0] sm:$0xff]
          %v2168 = vld [vmem:[%s420 + $0xa8] sm:$0xff]
          %v2169 = vld [vmem:[%s420 + $0xb0] sm:$0xff]
          %v2170 = vld [vmem:[%s420 + $0xb8] sm:$0xff]
          %v2171 = vld [vmem:[%s420 + $0xc0] sm:$0xff]
          %v2172 = vld [vmem:[%s420 + $0xc8] sm:$0xff]
          %v2173 = vld [vmem:[%s420 + $0xd0] sm:$0xff]
          %v2174 = vld [vmem:[%s420 + $0xd8] sm:$0xff]
          %v2175 = vld [vmem:[%s420 + $0xe0] sm:$0xff]
          %v2176 = vld [vmem:[%s420 + $0xe8] sm:$0xff]
          %v2177 = vld [vmem:[%s420 + $0xf0] sm:$0xff]
          %v2178 = vld [vmem:[%s420 + $0xf8] sm:$0xff]
          %v2179 = vadd.f32 %v2115, %v2147
          %v2180 = vadd.f32 %v2116, %v2148
          %v2181 = vadd.f32 %v2117, %v2149
          %v2182 = vadd.f32 %v2118, %v2150
          %v2183 = vadd.f32 %v2119, %v2151
          %v2184 = vadd.f32 %v2120, %v2152
          %v2185 = vadd.f32 %v2121, %v2153
          %v2186 = vadd.f32 %v2122, %v2154
          %v2187 = vadd.f32 %v2123, %v2155
          %v2188 = vadd.f32 %v2124, %v2156
          %v2189 = vadd.f32 %v2125, %v2157
          %v2190 = vadd.f32 %v2126, %v2158
          %v2191 = vadd.f32 %v2127, %v2159
          %v2192 = vadd.f32 %v2128, %v2160
          %v2193 = vadd.f32 %v2129, %v2161
          %v2194 = vadd.f32 %v2130, %v2162
          %v2195 = vadd.f32 %v2131, %v2163
          %v2196 = vadd.f32 %v2132, %v2164
          %v2197 = vadd.f32 %v2133, %v2165
          %v2198 = vadd.f32 %v2134, %v2166
          %v2199 = vadd.f32 %v2135, %v2167
          %v2200 = vadd.f32 %v2136, %v2168
          %v2201 = vadd.f32 %v2137, %v2169
          %v2202 = vadd.f32 %v2138, %v2170
          %v2203 = vadd.f32 %v2139, %v2171
          %v2204 = vadd.f32 %v2140, %v2172
          %v2205 = vadd.f32 %v2141, %v2173
          %v2206 = vadd.f32 %v2142, %v2174
          %v2207 = vadd.f32 %v2143, %v2175
          %v2208 = vadd.f32 %v2144, %v2176
          %v2209 = vadd.f32 %v2145, %v2177
          %v2210 = vadd.f32 %v2146, %v2178
          %2211 = vst [vmem:[%s496] sm:$0xff] %v2179
          %2212 = vst [vmem:[%s496 + $0x8] sm:$0xff] %v2180
          %2213 = vst [vmem:[%s496 + $0x10] sm:$0xff] %v2181
          %2214 = vst [vmem:[%s496 + $0x18] sm:$0xff] %v2182
          %2215 = vst [vmem:[%s496 + $0x20] sm:$0xff] %v2183
          %2216 = vst [vmem:[%s496 + $0x28] sm:$0xff] %v2184
          %2217 = vst [vmem:[%s496 + $0x30] sm:$0xff] %v2185
          %2218 = vst [vmem:[%s496 + $0x38] sm:$0xff] %v2186
          %2219 = vst [vmem:[%s496 + $0x40] sm:$0xff] %v2187
          %2220 = vst [vmem:[%s496 + $0x48] sm:$0xff] %v2188
          %2221 = vst [vmem:[%s496 + $0x50] sm:$0xff] %v2189
          %2222 = vst [vmem:[%s496 + $0x58] sm:$0xff] %v2190
          %2223 = vst [vmem:[%s496 + $0x60] sm:$0xff] %v2191
          %2224 = vst [vmem:[%s496 + $0x68] sm:$0xff] %v2192
          %2225 = vst [vmem:[%s496 + $0x70] sm:$0xff] %v2193
          %2226 = vst [vmem:[%s496 + $0x78] sm:$0xff] %v2194
          %2227 = vst [vmem:[%s496 + $0x80] sm:$0xff] %v2195
          %2228 = vst [vmem:[%s496 + $0x88] sm:$0xff] %v2196
          %2229 = vst [vmem:[%s496 + $0x90] sm:$0xff] %v2197
          %2230 = vst [vmem:[%s496 + $0x98] sm:$0xff] %v2198
          %2231 = vst [vmem:[%s496 + $0xa0] sm:$0xff] %v2199
          %2232 = vst [vmem:[%s496 + $0xa8] sm:$0xff] %v2200
          %2233 = vst [vmem:[%s496 + $0xb0] sm:$0xff] %v2201
          %2234 = vst [vmem:[%s496 + $0xb8] sm:$0xff] %v2202
          %2235 = vst [vmem:[%s496 + $0xc0] sm:$0xff] %v2203
          %2236 = vst [vmem:[%s496 + $0xc8] sm:$0xff] %v2204
          %2237 = vst [vmem:[%s496 + $0xd0] sm:$0xff] %v2205
          %2238 = vst [vmem:[%s496 + $0xd8] sm:$0xff] %v2206
          %2239 = vst [vmem:[%s496 + $0xe0] sm:$0xff] %v2207
          %2240 = vst [vmem:[%s496 + $0xe8] sm:$0xff] %v2208
          %2241 = vst [vmem:[%s496 + $0xf0] sm:$0xff] %v2209
          %2242 = vst [vmem:[%s496 + $0xf8] sm:$0xff] %v2210
        $region80: #{tpu_custom_call.1} parent=47 // pred_fallthru
          _
        %s2243 = sand.u32 %s225, 1
        %s2244 = scalar_lea.sflag [#allocation5], %s2243
        %s2245 = sand.u32 %s225, 1
        %s2246 = smul.addr %s2245, 256
        %s2247 = scalar_lea.vmem [#allocation14], %s2246
        // Predicated region
        $region81: #{tpu_custom_call.1} parent=47 // pred_check
          %p2248 = pneg %p235
        $region82: #{tpu_custom_call.1} parent=47 // pred_check_branch
          %2250 = sbr.rel (%p2248) target = $region84
        $region83: #{tpu_custom_call.1} parent=47 // pred_region
          %s2251 = smul.u32 16, %s35
          %2253 = vsyncadd %s2244, 0
          %s2254 = smul.addr %s2251, 2
          %s2255 = smul.addr %s2254, 8
          %s2256 = scalar_lea.hbm %s7, %s2255
          %s2257 = sshll.u32 %s2247, 4
          %s2258 = int_to_ptr.vmem [resolvable:$true] %s2257
          %s2259 = sshll.u32 %s2256, 4
          %s2260 = int_to_ptr.hbm [resolvable:$true] %s2259
          %2265 = dma.vmem_to_hbm [thread:$0]  %s2258, 4096, %s2260, %s2244, 256, 256, 16
        $region84: #{tpu_custom_call.1} parent=47 // pred_fallthru
          _
      $region48: #{tpu_custom_call.1} parent=5 // pred_fallthru
        _
      %p2266 = scmp.le.s32.totalorder 2, %s26
      // Predicated region
      $region85: #{tpu_custom_call.1} parent=5 // pred_check
        %p2267 = pneg %p2266
      $region86: #{tpu_custom_call.1} parent=5 // pred_check_branch
        %2269 = sbr.rel (%p2267) target = $region88
      $region87: #{tpu_custom_call.1} parent=5 // pred_region
        %s2270 = ssub.s32 %s26, 2
        // Predicated region
        $region89: #{tpu_custom_call.1} parent=87 // pred_check
          %p2271 = pneg %p241
        $region90: #{tpu_custom_call.1} parent=87 // pred_check_branch
          %2273 = sbr.rel (%p2271) target = $region92
        $region91: #{tpu_custom_call.1} parent=87 // pred_region
          %s2274 = sand.u32 %s226, 1
          %s2275 = scalar_lea.sflag [#allocation5], %s2274
          %s2276 = sand.u32 %s226, 1
          %s2277 = smul.addr %s2276, 256
          %s2278 = scalar_lea.vmem [#allocation14], %s2277
          %2280 = dma.done %s2275, 4096
        $region92: #{tpu_custom_call.1} parent=87 // pred_fallthru
          _
      $region88: #{tpu_custom_call.1} parent=5 // pred_fallthru
        _
    $region6: #{tpu_custom_call.1} parent=1 // loop_footer
      %s30 = sadd.s32 1, %s26
    $region7: #{tpu_custom_call.1} parent=1 // loop_footer_branch
      %25 = sbr.rel target = $region3
    $region8: #{tpu_custom_call.1} parent=1 // loop_exit
      _
    %2281 = vsyncpa [#allocation4], 1
    %s2282 = scalar_lea.sflag [#allocation4], 1
    %2283 = vsyncpa %s2282, 1
    %2284 = vsyncpa [#allocation7], 1
    %s2285 = scalar_lea.sflag [#allocation7], 1
    %2286 = vsyncpa %s2285, 1
    %2287 = vsyncpa [#allocation10], 1
    %s2288 = scalar_lea.sflag [#allocation10], 1
    %2289 = vsyncpa %s2288, 1
    %2290 = vsyncpa [#allocation13], 1
    %2291 = vsyncpa [#allocation5], 1
    %s2292 = scalar_lea.sflag [#allocation5], 1
    %2293 = vsyncpa %s2292, 1

</llo_original>
